<compile_context>
chip_gen: v7x
topology: tpu7x:2x2x1
jax: 0.10.0
libtpu: 0.0.40
codegen_flags: <defaults>
</compile_context>

<pallas_src>
import numpy as np
import jax
import jax.numpy as jnp
from jax.experimental import pallas as pl
from jax.experimental.pallas import tpu as pltpu

# ----------------------- small synthetic configuration -----------------------
B = 2
SR = 16000
N_FFT = 256
WIN = 256
HOP = 128
N_FRAMES = 16
AUDIO_LEN = WIN + (N_FRAMES - 1) * HOP          # 2176 samples
N_FREQ = N_FFT // 2                             # 128 rfft bins kept (Nyquist dropped)
N_MELS = 32
ENC_CHANNELS = [64, 64, 64]                     # encoder conv output channels
KERNELS = [3, 3, 1]                             # conv kernel sizes
EMB_DIM = 64                                    # speaker embedding size
NUM_CLASSES = 16
PREEMPH = 0.97
LOG_GUARD = 2.0 ** -24                          # NeMo log_zero_guard_value
STD_CONST = 1e-5                                # NeMo normalize_batch constant

# lane-aligned (padded) feature dims
FPAD = 128                                      # rfft bins (Nyquist dropped -> exact)
MPAD = 128                                      # mels 32 -> 128
CPAD = 128                                      # conv channels 64 -> 128
EPAD = 128                                      # emb 64 -> 128
LPAD = 128                                      # classes 16 -> 128

BLOCK_B = B                                     # batch elements folded per grid step
M_ROWS = BLOCK_B * N_FRAMES                     # matmul M dim (32)


# ------------------------------ fused kernel body -----------------------------
def fused_speaker_kernel(
        frames_ref, trig_ref, fb_ref,
        c1w0_ref, c1w1_ref, c1w2_ref, c1s_ref, c1h_ref,
        c2w0_ref, c2w1_ref, c2w2_ref, c2s_ref, c2h_ref,
        c3w_ref, c3s_ref, c3h_ref,
        dw1_ref, db1_ref, dbs_ref, dbh_ref, dw2_ref, db2_ref,
        logits_ref, emb_ref):
    """One grid step == BLOCK_B batch elements; everything stays in VMEM/vregs."""
    T = N_FRAMES

    # ---- mel front-end: windowed DFT power -> mel -> log -> per-feature norm
    frames = frames_ref[...].reshape(M_ROWS, WIN)                    # (M, WIN)
    spec = jnp.dot(frames, trig_ref[...], preferred_element_type=jnp.float32)
    re = spec[:, :FPAD]
    im = spec[:, FPAD:]
    power = re * re + im * im                                        # (M, FPAD)
    mel = jnp.dot(power, fb_ref[...], preferred_element_type=jnp.float32)
    logmel = jnp.log(mel + LOG_GUARD)                                # (M, MPAD)

    # per-feature normalization is per batch element over time -> 3-D view, axis=1
    lm3 = logmel.reshape(BLOCK_B, T, MPAD)
    mean = jnp.mean(lm3, axis=1, keepdims=True)
    cent = lm3 - mean
    var = jnp.sum(cent * cent, axis=1, keepdims=True) / (T - 1)      # unbiased
    # TODO(synk): approx EUP reciprocal deviates ~1e-4 rel. from NeMo's exact divide.
    inv_std = pl.reciprocal(jnp.sqrt(var) + STD_CONST, approx=True)
    x = (cent * inv_std).reshape(M_ROWS, MPAD)                       # (M, MPAD)

    # boundary masks for the 'same' conv padding: the roll wraps rows across batch
    # boundaries, and those rows are exactly the ones that must be zeroed anyway.
    t_idx = jax.lax.broadcasted_iota(jnp.int32, (M_ROWS, 1), 0) % T
    first_mask = t_idx == 0
    last_mask = t_idx == T - 1

    def conv3_bn_relu(x, w0_ref, w1_ref, w2_ref, s_ref, h_ref):
        # Conv1d(k=3, padding=1): time shifts on the XLU (pltpu.roll) + three
        # accumulated K=128 matmuls (no im2col concat, no MXU shift matrices).
        x_prev = jnp.where(first_mask, 0.0, pltpu.roll(x, shift=1, axis=0))
        x_next = jnp.where(last_mask, 0.0, pltpu.roll(x, shift=M_ROWS - 1, axis=0))
        y = (jnp.dot(x_prev.astype(jnp.bfloat16), w0_ref[...],
                     preferred_element_type=jnp.float32)
             + jnp.dot(x.astype(jnp.bfloat16), w1_ref[...],
                       preferred_element_type=jnp.float32)
             + jnp.dot(x_next.astype(jnp.bfloat16), w2_ref[...],
                       preferred_element_type=jnp.float32))
        return jnp.maximum(y * s_ref[...] + h_ref[...], 0.0)         # BN(eval)+ReLU

    x = conv3_bn_relu(x, c1w0_ref, c1w1_ref, c1w2_ref, c1s_ref, c1h_ref)  # (M, CPAD)
    x = conv3_bn_relu(x, c2w0_ref, c2w1_ref, c2w2_ref, c2s_ref, c2h_ref)  # (M, CPAD)
    y = jnp.dot(x.astype(jnp.bfloat16), c3w_ref[...],
                preferred_element_type=jnp.float32)                   # k=1 conv
    x = jnp.maximum(y * c3s_ref[...] + c3h_ref[...], 0.0)             # (M, CPAD)

    # ---- SpeakerDecoder: stats pooling over time (sublane reduce), emb, logits
    x3 = x.reshape(BLOCK_B, T, CPAD)
    mu = jnp.mean(x3, axis=1, keepdims=True)                          # (BB, 1, CPAD)
    d = x3 - mu
    var_t = jnp.sum(d * d, axis=1, keepdims=True) / (T - 1)
    sd = jnp.sqrt(var_t)                                              # torch.std (unbiased)
    pooled = jnp.concatenate([mu[:, 0, :], sd[:, 0, :]], axis=1)      # (BB, 2*CPAD)

    lin = (jnp.dot(pooled.astype(jnp.bfloat16), dw1_ref[...],
                   preferred_element_type=jnp.float32) + db1_ref[...])
    emb = lin * dbs_ref[...] + dbh_ref[...]                           # Linear + BN
    emb_ref[...] = emb                                                # pre-ReLU emb (NeMo)
    # TODO(synk): verify this ReLU against the target NeMo SpeakerDecoder version.
    hidden = jnp.maximum(emb, 0.0)
    logits_ref[...] = (jnp.dot(hidden.astype(jnp.bfloat16), dw2_ref[...],
                               preferred_element_type=jnp.float32) + db2_ref[...])


# ------------------------------ wrapper / glue --------------------------------
def speaker_vector_forward(audio, params, mel_consts):
    trig, fb = mel_consts
    # pre-emphasis (NeMo FilterbankFeatures) + framing: tiny one-shot XLA glue.
    # TODO(synk): center/reflect STFT padding, dither and length-based time
    # masking are omitted (eval mode, equal-length synthetic batch).
    audio = jnp.concatenate(
        [audio[:, :1], audio[:, 1:] - PREEMPH * audio[:, :-1]], axis=1)
    idx = np.arange(N_FRAMES)[:, None] * HOP + np.arange(WIN)[None, :]
    frames = audio[:, idx]                                            # (B, T, WIN)

    c1, c2, c3 = params["convs"]
    const2d = lambda b: (0, 0)

    in_specs = [
        pl.BlockSpec((BLOCK_B, N_FRAMES, WIN), lambda b: (b, 0, 0)),
        pl.BlockSpec((WIN, 2 * FPAD), const2d),
        pl.BlockSpec((FPAD, MPAD), const2d),
        # conv1: 3 per-tap weights + folded-BN scale/shift
        pl.BlockSpec((MPAD, CPAD), const2d),
        pl.BlockSpec((MPAD, CPAD), const2d),
        pl.BlockSpec((MPAD, CPAD), const2d),
        pl.BlockSpec((1, CPAD), const2d),
        pl.BlockSpec((1, CPAD), const2d),
        # conv2
        pl.BlockSpec((CPAD, CPAD), const2d),
        pl.BlockSpec((CPAD, CPAD), const2d),
        pl.BlockSpec((CPAD, CPAD), const2d),
        pl.BlockSpec((1, CPAD), const2d),
        pl.BlockSpec((1, CPAD), const2d),
        # conv3 (k=1)
        pl.BlockSpec((CPAD, CPAD), const2d),
        pl.BlockSpec((1, CPAD), const2d),
        pl.BlockSpec((1, CPAD), const2d),
        # decoder
        pl.BlockSpec((2 * CPAD, EPAD), const2d),
        pl.BlockSpec((1, EPAD), const2d),
        pl.BlockSpec((1, EPAD), const2d),
        pl.BlockSpec((1, EPAD), const2d),
        pl.BlockSpec((EPAD, LPAD), const2d),
        pl.BlockSpec((1, LPAD), const2d),
    ]

    logits_pad, emb_pad = pl.pallas_call(
        fused_speaker_kernel,
        out_shape=(jax.ShapeDtypeStruct((B, LPAD), jnp.float32),
                   jax.ShapeDtypeStruct((B, EPAD), jnp.float32)),
        grid=(pl.cdiv(B, BLOCK_B),),
        in_specs=in_specs,
        out_specs=(pl.BlockSpec((BLOCK_B, LPAD), lambda b: (b, 0)),
                   pl.BlockSpec((BLOCK_B, EPAD), lambda b: (b, 0))),
        compiler_params=pltpu.CompilerParams(
            dimension_semantics=("parallel",)),                       # v7x: split batch blocks
    )(frames, trig, fb,
      c1[0], c1[1], c1[2], c1[3], c1[4],
      c2[0], c2[1], c2[2], c2[3], c2[4],
      c3[0], c3[1], c3[2],
      params["dw1"], params["db1"], params["dbs"], params["dbh"],
      params["dw2"], params["db2"])

    return logits_pad[:, :NUM_CLASSES], emb_pad[:, :EMB_DIM]


# --------------------------- deterministic constants --------------------------
def mel_filterbank():
    def hz_to_mel(f): return 2595.0 * np.log10(1.0 + f / 700.0)
    def mel_to_hz(m): return 700.0 * (10.0 ** (m / 2595.0) - 1.0)
    n_full = N_FFT // 2 + 1
    freqs = np.linspace(0.0, SR / 2.0, n_full)
    mel_pts = np.linspace(hz_to_mel(0.0), hz_to_mel(SR / 2.0), N_MELS + 2)
    hz_pts = mel_to_hz(mel_pts)
    fb = np.zeros((n_full, N_MELS), dtype=np.float64)
    for m in range(N_MELS):
        f_l, f_c, f_r = hz_pts[m], hz_pts[m + 1], hz_pts[m + 2]
        left = (freqs - f_l) / max(f_c - f_l, 1e-9)
        right = (f_r - freqs) / max(f_r - f_c, 1e-9)
        fb[:, m] = np.maximum(0.0, np.minimum(left, right))
    return fb[:N_FREQ]          # drop the Nyquist row (FPAD=128 lane-exact)


def build_mel_constants():
    n = np.arange(WIN)
    window = 0.5 - 0.5 * np.cos(2.0 * np.pi * n / WIN)       # periodic Hann
    k = np.arange(N_FREQ)                                     # 128 bins (no Nyquist)
    ang = 2.0 * np.pi * np.outer(n, k) / N_FFT
    # cos|sin packed side by side (window folded in): one MXU matmul for the DFT
    trig = np.zeros((WIN, 2 * FPAD), dtype=np.float32)
    trig[:, :N_FREQ] = (window[:, None] * np.cos(ang)).astype(np.float32)
    trig[:, FPAD:FPAD + N_FREQ] = (-window[:, None] * np.sin(ang)).astype(np.float32)
    fbpad = np.zeros((FPAD, MPAD), dtype=np.float32)
    fbpad[:N_FREQ, :N_MELS] = mel_filterbank().astype(np.float32)
    return jnp.asarray(trig), jnp.asarray(fbpad)


def init_params(key):
    keys = jax.random.split(key, 20)
    params = {}
    convs = []
    cin, cin_pad = N_MELS, MPAD
    for li, (cout, k) in enumerate(zip(ENC_CHANNELS, KERNELS)):
        w = (jax.random.normal(keys[li], (k, cin, cout), jnp.float32)
             / np.sqrt(cin * k))
        bias = jnp.zeros((cout,), jnp.float32)
        gamma = 1.0 + 0.1 * jax.random.normal(keys[li + 4], (cout,), jnp.float32)
        beta = 0.1 * jax.random.normal(keys[li + 8], (cout,), jnp.float32)
        r_mean = jnp.zeros((cout,), jnp.float32)
        r_var = jnp.ones((cout,), jnp.float32)
        scale = gamma / jnp.sqrt(r_var + 1e-5)               # BN eval folding
        shift = beta + (bias - r_mean) * scale
        # per-tap bf16 weight blocks (one (cin_pad, CPAD) matrix per kernel tap)
        taps = []
        for dk in range(k):
            wpad = jnp.zeros((cin_pad, CPAD), jnp.bfloat16)
            wpad = wpad.at[:cin, :cout].set(w[dk].astype(jnp.bfloat16))
            taps.append(wpad)
        spad = jnp.zeros((1, CPAD), jnp.float32).at[0, :cout].set(scale)
        hpad = jnp.zeros((1, CPAD), jnp.float32).at[0, :cout].set(shift)
        convs.append(tuple(taps) + (spad, hpad))
        cin, cin_pad = cout, CPAD
    params["convs"] = convs

    c = ENC_CHANNELS[-1]
    w1m = jax.random.normal(keys[12], (c, EMB_DIM), jnp.float32) / np.sqrt(2 * c)
    w1s = jax.random.normal(keys[13], (c, EMB_DIM), jnp.float32) / np.sqrt(2 * c)
    # fused pooled weight: rows [0:CPAD) act on the mean half, [CPAD:2*CPAD) on std
    dw1 = jnp.zeros((2 * CPAD, EPAD), jnp.bfloat16)
    dw1 = dw1.at[:c, :EMB_DIM].set(w1m.astype(jnp.bfloat16))
    dw1 = dw1.at[CPAD:CPAD + c, :EMB_DIM].set(w1s.astype(jnp.bfloat16))
    params["dw1"] = dw1
    params["db1"] = jnp.zeros((1, EPAD), jnp.float32)
    g1 = 1.0 + 0.1 * jax.random.normal(keys[14], (EMB_DIM,), jnp.float32)
    be1 = 0.1 * jax.random.normal(keys[15], (EMB_DIM,), jnp.float32)
    params["dbs"] = jnp.zeros((1, EPAD), jnp.float32).at[0, :EMB_DIM].set(
        g1 / jnp.sqrt(1.0 + 1e-5))                           # running_var = 1
    params["dbh"] = jnp.zeros((1, EPAD), jnp.float32).at[0, :EMB_DIM].set(be1)
    w2 = (jax.random.normal(keys[16], (EMB_DIM, NUM_CLASSES), jnp.float32)
          / np.sqrt(EMB_DIM))
    params["dw2"] = jnp.zeros((EPAD, LPAD), jnp.bfloat16).at[
        :EMB_DIM, :NUM_CLASSES].set(w2.astype(jnp.bfloat16))
    params["db2"] = jnp.zeros((1, LPAD), jnp.float32)
    return params


# ------------------------------------ main ------------------------------------
if __name__ == "__main__":
    audio = jax.random.normal(jax.random.PRNGKey(0), (B, AUDIO_LEN),
                              dtype=jnp.float32)
    params = init_params(jax.random.PRNGKey(1))
    mel_consts = build_mel_constants()

    forward = jax.jit(speaker_vector_forward)
    logits, emb = forward(audio, params, mel_consts)
    jax.block_until_ready((logits, emb))

    assert logits.shape == (B, NUM_CLASSES)
    assert emb.shape == (B, EMB_DIM)
    assert bool(jnp.all(jnp.isfinite(logits))) and bool(jnp.all(jnp.isfinite(emb)))
    print("KERNEL_OK")
</pallas_src>

<mosaic_0001>
module attributes {stable_mosaic.version = 11 : i64} {
  func.func private @main(%arg0: i32) attributes {dimension_semantics = [#tpu.dimension_semantics<core_parallel>], iteration_bounds = array<i64: 2>, tpu.core_type = #tpu.core_type<sc_scalar_subcore>, window_params = []} {
    return
  }
}

module attributes {stable_mosaic.version = 11 : i64} {
  func.func private @main(%arg0: i32) attributes {dimension_semantics = [#tpu.dimension_semantics<core_parallel>], iteration_bounds = array<i64: 2>, tpu.core_type = #tpu.core_type<sc_scalar_subcore>, window_params = []} {
    return
  }
}

module attributes {stable_mosaic.version = 11 : i64} {
  func.func @fused_speaker_kernel(%arg0: i32, %arg1: memref<2x16x256xf32, #tpu.memory_space<vmem>>, %arg2: memref<256x256xf32, #tpu.memory_space<vmem>>, %arg3: memref<128x128xf32, #tpu.memory_space<vmem>>, %arg4: memref<128x128xbf16, #tpu.memory_space<vmem>>, %arg5: memref<128x128xbf16, #tpu.memory_space<vmem>>, %arg6: memref<128x128xbf16, #tpu.memory_space<vmem>>, %arg7: memref<1x128xf32, #tpu.memory_space<vmem>>, %arg8: memref<1x128xf32, #tpu.memory_space<vmem>>, %arg9: memref<128x128xbf16, #tpu.memory_space<vmem>>, %arg10: memref<128x128xbf16, #tpu.memory_space<vmem>>, %arg11: memref<128x128xbf16, #tpu.memory_space<vmem>>, %arg12: memref<1x128xf32, #tpu.memory_space<vmem>>, %arg13: memref<1x128xf32, #tpu.memory_space<vmem>>, %arg14: memref<128x128xbf16, #tpu.memory_space<vmem>>, %arg15: memref<1x128xf32, #tpu.memory_space<vmem>>, %arg16: memref<1x128xf32, #tpu.memory_space<vmem>>, %arg17: memref<256x128xbf16, #tpu.memory_space<vmem>>, %arg18: memref<1x128xf32, #tpu.memory_space<vmem>>, %arg19: memref<1x128xf32, #tpu.memory_space<vmem>>, %arg20: memref<1x128xf32, #tpu.memory_space<vmem>>, %arg21: memref<128x128xbf16, #tpu.memory_space<vmem>>, %arg22: memref<1x128xf32, #tpu.memory_space<vmem>>, %arg23: memref<2x128xf32, #tpu.memory_space<vmem>>, %arg24: memref<2x128xf32, #tpu.memory_space<vmem>>) attributes {dimension_semantics = [#tpu.dimension_semantics<parallel>], iteration_bounds = array<i64: 1>, scalar_prefetch = 0 : i64, scratch_operands = 0 : i64, tpu.core_type = #tpu.core_type<tc>, window_params = [{transform_indices = @transform_0, window_bounds = array<i64: 2, 16, 256>}, {pipeline_mode = #tpu.pipeline_mode<synchronous>, transform_indices = @transform_1, window_bounds = array<i64: 256, 256>}, {pipeline_mode = #tpu.pipeline_mode<synchronous>, transform_indices = @transform_2, window_bounds = array<i64: 128, 128>}, {pipeline_mode = #tpu.pipeline_mode<synchronous>, transform_indices = @transform_3, window_bounds = array<i64: 128, 128>}, {pipeline_mode = #tpu.pipeline_mode<synchronous>, transform_indices = @transform_4, window_bounds = array<i64: 128, 128>}, {pipeline_mode = #tpu.pipeline_mode<synchronous>, transform_indices = @transform_5, window_bounds = array<i64: 128, 128>}, {pipeline_mode = #tpu.pipeline_mode<synchronous>, transform_indices = @transform_6, window_bounds = array<i64: 1, 128>}, {pipeline_mode = #tpu.pipeline_mode<synchronous>, transform_indices = @transform_7, window_bounds = array<i64: 1, 128>}, {pipeline_mode = #tpu.pipeline_mode<synchronous>, transform_indices = @transform_8, window_bounds = array<i64: 128, 128>}, {pipeline_mode = #tpu.pipeline_mode<synchronous>, transform_indices = @transform_9, window_bounds = array<i64: 128, 128>}, {pipeline_mode = #tpu.pipeline_mode<synchronous>, transform_indices = @transform_10, window_bounds = array<i64: 128, 128>}, {pipeline_mode = #tpu.pipeline_mode<synchronous>, transform_indices = @transform_11, window_bounds = array<i64: 1, 128>}, {pipeline_mode = #tpu.pipeline_mode<synchronous>, transform_indices = @transform_12, window_bounds = array<i64: 1, 128>}, {pipeline_mode = #tpu.pipeline_mode<synchronous>, transform_indices = @transform_13, window_bounds = array<i64: 128, 128>}, {pipeline_mode = #tpu.pipeline_mode<synchronous>, transform_indices = @transform_14, window_bounds = array<i64: 1, 128>}, {pipeline_mode = #tpu.pipeline_mode<synchronous>, transform_indices = @transform_15, window_bounds = array<i64: 1, 128>}, {pipeline_mode = #tpu.pipeline_mode<synchronous>, transform_indices = @transform_16, window_bounds = array<i64: 256, 128>}, {pipeline_mode = #tpu.pipeline_mode<synchronous>, transform_indices = @transform_17, window_bounds = array<i64: 1, 128>}, {pipeline_mode = #tpu.pipeline_mode<synchronous>, transform_indices = @transform_18, window_bounds = array<i64: 1, 128>}, {pipeline_mode = #tpu.pipeline_mode<synchronous>, transform_indices = @transform_19, window_bounds = array<i64: 1, 128>}, {pipeline_mode = #tpu.pipeline_mode<synchronous>, transform_indices = @transform_20, window_bounds = array<i64: 128, 128>}, {pipeline_mode = #tpu.pipeline_mode<synchronous>, transform_indices = @transform_21, window_bounds = array<i64: 1, 128>}, {transform_indices = @transform_22, window_bounds = array<i64: 2, 128>}, {transform_indices = @transform_23, window_bounds = array<i64: 2, 128>}]} {
    %c0 = arith.constant 0 : index
    %c0_0 = arith.constant 0 : index
    %c0_1 = arith.constant 0 : index
    %0 = vector.load %arg1[%c0, %c0_0, %c0_1] : memref<2x16x256xf32, #tpu.memory_space<vmem>>, vector<2x16x256xf32>
    %1 = vector.shape_cast %0 : vector<2x16x256xf32> to vector<32x256xf32>
    %c0_2 = arith.constant 0 : index
    %c0_3 = arith.constant 0 : index
    %2 = vector.load %arg2[%c0_2, %c0_3] : memref<256x256xf32, #tpu.memory_space<vmem>>, vector<256x256xf32>
    %cst = arith.constant dense<0.000000e+00> : vector<32x256xf32>
    %3 = tpu.matmul %1, %2, %cst {dimension_numbers = #tpu.dot_dimension_numbers<[1], [0], [0], [1], [0, 0, 1, 1], [], []>} : vector<32x256xf32>, vector<256x256xf32>, vector<32x256xf32> -> vector<32x256xf32>
    %4 = vector.extract_strided_slice %3 {offsets = [0, 0], sizes = [32, 128], strides = [1, 1]} : vector<32x256xf32> to vector<32x128xf32>
    %5 = vector.extract_strided_slice %3 {offsets = [0, 128], sizes = [32, 128], strides = [1, 1]} : vector<32x256xf32> to vector<32x128xf32>
    %6 = arith.mulf %4, %4 : vector<32x128xf32>
    %7 = arith.mulf %5, %5 : vector<32x128xf32>
    %8 = arith.addf %6, %7 : vector<32x128xf32>
    %c0_4 = arith.constant 0 : index
    %c0_5 = arith.constant 0 : index
    %9 = vector.load %arg3[%c0_4, %c0_5] : memref<128x128xf32, #tpu.memory_space<vmem>>, vector<128x128xf32>
    %cst_6 = arith.constant dense<0.000000e+00> : vector<32x128xf32>
    %10 = tpu.matmul %8, %9, %cst_6 {dimension_numbers = #tpu.dot_dimension_numbers<[1], [0], [0], [1], [0, 0, 1, 1], [], []>} : vector<32x128xf32>, vector<128x128xf32>, vector<32x128xf32> -> vector<32x128xf32>
    %cst_7 = arith.constant 5.96046448E-8 : f32
    %11 = vector.broadcast %cst_7 : f32 to vector<32x128xf32>
    %12 = arith.addf %10, %11 : vector<32x128xf32>
    %13 = math.log %12 : vector<32x128xf32>
    %14 = vector.shape_cast %13 : vector<32x128xf32> to vector<2x16x128xf32>
    %cst_8 = arith.constant dense<0.000000e+00> : vector<2x128xf32>
    %15 = vector.multi_reduction <add>, %14, %cst_8 [1] : vector<2x16x128xf32> to vector<2x128xf32>
    %16 = vector.shape_cast %15 : vector<2x128xf32> to vector<2x1x128xf32>
    %cst_9 = arith.constant 1.600000e+01 : f32
    %17 = vector.broadcast %cst_9 : f32 to vector<2x1x128xf32>
    %18 = arith.divf %16, %17 : vector<2x1x128xf32>
    %19 = vector.broadcast %18 : vector<2x1x128xf32> to vector<2x16x128xf32>
    %20 = arith.subf %14, %19 : vector<2x16x128xf32>
    %21 = arith.mulf %20, %20 : vector<2x16x128xf32>
    %cst_10 = arith.constant dense<0.000000e+00> : vector<2x128xf32>
    %22 = vector.multi_reduction <add>, %21, %cst_10 [1] : vector<2x16x128xf32> to vector<2x128xf32>
    %23 = vector.shape_cast %22 : vector<2x128xf32> to vector<2x1x128xf32>
    %cst_11 = arith.constant 1.500000e+01 : f32
    %24 = vector.broadcast %cst_11 : f32 to vector<2x1x128xf32>
    %25 = arith.divf %23, %24 : vector<2x1x128xf32>
    %26 = math.sqrt %25 : vector<2x1x128xf32>
    %cst_12 = arith.constant 9.99999974E-6 : f32
    %27 = vector.broadcast %cst_12 : f32 to vector<2x1x128xf32>
    %28 = arith.addf %26, %27 : vector<2x1x128xf32>
    %29 = tpu.reciprocal %28 {approx = true} : vector<2x1x128xf32> -> vector<2x1x128xf32>
    %30 = vector.broadcast %29 : vector<2x1x128xf32> to vector<2x16x128xf32>
    %31 = arith.mulf %20, %30 : vector<2x16x128xf32>
    %32 = vector.shape_cast %31 : vector<2x16x128xf32> to vector<32x128xf32>
    %33 = tpu.iota {dimensions = array<i32: 0>} : vector<32x1xi32>
    %c16_i32 = arith.constant 16 : i32
    %c0_i32 = arith.constant 0 : i32
    %34 = arith.cmpi eq, %c16_i32, %c0_i32 : i32
    %c1_i32 = arith.constant 1 : i32
    %35 = arith.select %34, %c1_i32, %c16_i32 : i32
    %36 = vector.broadcast %35 : i32 to vector<32x1xi32>
    %37 = arith.remsi %33, %36 : vector<32x1xi32>
    %c0_i32_13 = arith.constant 0 : i32
    %38 = vector.broadcast %c0_i32_13 : i32 to vector<32x1xi32>
    %39 = arith.cmpi ne, %37, %38 : vector<32x1xi32>
    %c0_i32_14 = arith.constant 0 : i32
    %40 = vector.broadcast %c0_i32_14 : i32 to vector<32x1xi32>
    %41 = arith.cmpi slt, %37, %40 : vector<32x1xi32>
    %c0_i32_15 = arith.constant 0 : i32
    %42 = arith.cmpi slt, %35, %c0_i32_15 : i32
    %43 = vector.broadcast %42 : i1 to vector<32x1xi1>
    %44 = vector.broadcast %43 : vector<32x1xi1> to vector<32x1xi1>
    %45 = arith.xori %41, %44 : vector<32x1xi1>
    %46 = arith.andi %45, %39 : vector<32x1xi1>
    %47 = vector.broadcast %35 : i32 to vector<32x1xi32>
    %48 = arith.addi %37, %47 : vector<32x1xi32>
    %49 = arith.select %46, %48, %37 : vector<32x1xi1>, vector<32x1xi32>
    %c0_i32_16 = arith.constant 0 : i32
    %50 = vector.broadcast %c0_i32_16 : i32 to vector<32x1xi32>
    %51 = arith.cmpi eq, %49, %50 : vector<32x1xi32>
    %c15_i32 = arith.constant 15 : i32
    %52 = vector.broadcast %c15_i32 : i32 to vector<32x1xi32>
    %53 = arith.cmpi eq, %49, %52 : vector<32x1xi32>
    %c1_i32_17 = arith.constant 1 : i32
    %54 = tpu.dynamic_rotate %32 by %c1_i32_17 dim 0 : vector<32x128xf32>, i32 -> vector<32x128xf32>
    %cst_18 = arith.constant 0.000000e+00 : f32
    %55 = vector.shape_cast %51 : vector<32x1xi1> to vector<32x1xi1>
    %56 = vector.broadcast %55 : vector<32x1xi1> to vector<32x128xi1>
    %57 = vector.broadcast %cst_18 : f32 to vector<32x128xf32>
    %58 = arith.select %56, %57, %54 : vector<32x128xi1>, vector<32x128xf32>
    %c31_i32 = arith.constant 31 : i32
    %59 = tpu.dynamic_rotate %32 by %c31_i32 dim 0 : vector<32x128xf32>, i32 -> vector<32x128xf32>
    %cst_19 = arith.constant 0.000000e+00 : f32
    %60 = vector.shape_cast %53 : vector<32x1xi1> to vector<32x1xi1>
    %61 = vector.broadcast %60 : vector<32x1xi1> to vector<32x128xi1>
    %62 = vector.broadcast %cst_19 : f32 to vector<32x128xf32>
    %63 = arith.select %61, %62, %59 : vector<32x128xi1>, vector<32x128xf32>
    %64 = arith.truncf %58 : vector<32x128xf32> to vector<32x128xbf16>
    %c0_20 = arith.constant 0 : index
    %c0_21 = arith.constant 0 : index
    %65 = vector.load %arg4[%c0_20, %c0_21] : memref<128x128xbf16, #tpu.memory_space<vmem>>, vector<128x128xbf16>
    %cst_22 = arith.constant dense<0.000000e+00> : vector<32x128xf32>
    %66 = tpu.matmul %64, %65, %cst_22 {dimension_numbers = #tpu.dot_dimension_numbers<[1], [0], [0], [1], [0, 0, 1, 1], [], []>} : vector<32x128xbf16>, vector<128x128xbf16>, vector<32x128xf32> -> vector<32x128xf32>
    %67 = arith.truncf %32 : vector<32x128xf32> to vector<32x128xbf16>
    %c0_23 = arith.constant 0 : index
    %c0_24 = arith.constant 0 : index
    %68 = vector.load %arg5[%c0_23, %c0_24] : memref<128x128xbf16, #tpu.memory_space<vmem>>, vector<128x128xbf16>
    %cst_25 = arith.constant dense<0.000000e+00> : vector<32x128xf32>
    %69 = tpu.matmul %67, %68, %cst_25 {dimension_numbers = #tpu.dot_dimension_numbers<[1], [0], [0], [1], [0, 0, 1, 1], [], []>} : vector<32x128xbf16>, vector<128x128xbf16>, vector<32x128xf32> -> vector<32x128xf32>
    %70 = arith.addf %66, %69 : vector<32x128xf32>
    %71 = arith.truncf %63 : vector<32x128xf32> to vector<32x128xbf16>
    %c0_26 = arith.constant 0 : index
    %c0_27 = arith.constant 0 : index
    %72 = vector.load %arg6[%c0_26, %c0_27] : memref<128x128xbf16, #tpu.memory_space<vmem>>, vector<128x128xbf16>
    %cst_28 = arith.constant dense<0.000000e+00> : vector<32x128xf32>
    %73 = tpu.matmul %71, %72, %cst_28 {dimension_numbers = #tpu.dot_dimension_numbers<[1], [0], [0], [1], [0, 0, 1, 1], [], []>} : vector<32x128xbf16>, vector<128x128xbf16>, vector<32x128xf32> -> vector<32x128xf32>
    %74 = arith.addf %70, %73 : vector<32x128xf32>
    %c0_29 = arith.constant 0 : index
    %c0_30 = arith.constant 0 : index
    %75 = vector.load %arg7[%c0_29, %c0_30] : memref<1x128xf32, #tpu.memory_space<vmem>>, vector<1x128xf32>
    %76 = vector.broadcast %75 : vector<1x128xf32> to vector<32x128xf32>
    %77 = arith.mulf %74, %76 : vector<32x128xf32>
    %c0_31 = arith.constant 0 : index
    %c0_32 = arith.constant 0 : index
    %78 = vector.load %arg8[%c0_31, %c0_32] : memref<1x128xf32, #tpu.memory_space<vmem>>, vector<1x128xf32>
    %79 = vector.broadcast %78 : vector<1x128xf32> to vector<32x128xf32>
    %80 = arith.addf %77, %79 : vector<32x128xf32>
    %cst_33 = arith.constant 0.000000e+00 : f32
    %81 = vector.broadcast %cst_33 : f32 to vector<32x128xf32>
    %82 = arith.maximumf %80, %81 : vector<32x128xf32>
    %c1_i32_34 = arith.constant 1 : i32
    %83 = tpu.dynamic_rotate %82 by %c1_i32_34 dim 0 : vector<32x128xf32>, i32 -> vector<32x128xf32>
    %cst_35 = arith.constant 0.000000e+00 : f32
    %84 = vector.shape_cast %51 : vector<32x1xi1> to vector<32x1xi1>
    %85 = vector.broadcast %84 : vector<32x1xi1> to vector<32x128xi1>
    %86 = vector.broadcast %cst_35 : f32 to vector<32x128xf32>
    %87 = arith.select %85, %86, %83 : vector<32x128xi1>, vector<32x128xf32>
    %c31_i32_36 = arith.constant 31 : i32
    %88 = tpu.dynamic_rotate %82 by %c31_i32_36 dim 0 : vector<32x128xf32>, i32 -> vector<32x128xf32>
    %cst_37 = arith.constant 0.000000e+00 : f32
    %89 = vector.shape_cast %53 : vector<32x1xi1> to vector<32x1xi1>
    %90 = vector.broadcast %89 : vector<32x1xi1> to vector<32x128xi1>
    %91 = vector.broadcast %cst_37 : f32 to vector<32x128xf32>
    %92 = arith.select %90, %91, %88 : vector<32x128xi1>, vector<32x128xf32>
    %93 = arith.truncf %87 : vector<32x128xf32> to vector<32x128xbf16>
    %c0_38 = arith.constant 0 : index
    %c0_39 = arith.constant 0 : index
    %94 = vector.load %arg9[%c0_38, %c0_39] : memref<128x128xbf16, #tpu.memory_space<vmem>>, vector<128x128xbf16>
    %cst_40 = arith.constant dense<0.000000e+00> : vector<32x128xf32>
    %95 = tpu.matmul %93, %94, %cst_40 {dimension_numbers = #tpu.dot_dimension_numbers<[1], [0], [0], [1], [0, 0, 1, 1], [], []>} : vector<32x128xbf16>, vector<128x128xbf16>, vector<32x128xf32> -> vector<32x128xf32>
    %96 = arith.truncf %82 : vector<32x128xf32> to vector<32x128xbf16>
    %c0_41 = arith.constant 0 : index
    %c0_42 = arith.constant 0 : index
    %97 = vector.load %arg10[%c0_41, %c0_42] : memref<128x128xbf16, #tpu.memory_space<vmem>>, vector<128x128xbf16>
    %cst_43 = arith.constant dense<0.000000e+00> : vector<32x128xf32>
    %98 = tpu.matmul %96, %97, %cst_43 {dimension_numbers = #tpu.dot_dimension_numbers<[1], [0], [0], [1], [0, 0, 1, 1], [], []>} : vector<32x128xbf16>, vector<128x128xbf16>, vector<32x128xf32> -> vector<32x128xf32>
    %99 = arith.addf %95, %98 : vector<32x128xf32>
    %100 = arith.truncf %92 : vector<32x128xf32> to vector<32x128xbf16>
    %c0_44 = arith.constant 0 : index
    %c0_45 = arith.constant 0 : index
    %101 = vector.load %arg11[%c0_44, %c0_45] : memref<128x128xbf16, #tpu.memory_space<vmem>>, vector<128x128xbf16>
    %cst_46 = arith.constant dense<0.000000e+00> : vector<32x128xf32>
    %102 = tpu.matmul %100, %101, %cst_46 {dimension_numbers = #tpu.dot_dimension_numbers<[1], [0], [0], [1], [0, 0, 1, 1], [], []>} : vector<32x128xbf16>, vector<128x128xbf16>, vector<32x128xf32> -> vector<32x128xf32>
    %103 = arith.addf %99, %102 : vector<32x128xf32>
    %c0_47 = arith.constant 0 : index
    %c0_48 = arith.constant 0 : index
    %104 = vector.load %arg12[%c0_47, %c0_48] : memref<1x128xf32, #tpu.memory_space<vmem>>, vector<1x128xf32>
    %105 = vector.broadcast %104 : vector<1x128xf32> to vector<32x128xf32>
    %106 = arith.mulf %103, %105 : vector<32x128xf32>
    %c0_49 = arith.constant 0 : index
    %c0_50 = arith.constant 0 : index
    %107 = vector.load %arg13[%c0_49, %c0_50] : memref<1x128xf32, #tpu.memory_space<vmem>>, vector<1x128xf32>
    %108 = vector.broadcast %107 : vector<1x128xf32> to vector<32x128xf32>
    %109 = arith.addf %106, %108 : vector<32x128xf32>
    %cst_51 = arith.constant 0.000000e+00 : f32
    %110 = vector.broadcast %cst_51 : f32 to vector<32x128xf32>
    %111 = arith.maximumf %109, %110 : vector<32x128xf32>
    %112 = arith.truncf %111 : vector<32x128xf32> to vector<32x128xbf16>
    %c0_52 = arith.constant 0 : index
    %c0_53 = arith.constant 0 : index
    %113 = vector.load %arg14[%c0_52, %c0_53] : memref<128x128xbf16, #tpu.memory_space<vmem>>, vector<128x128xbf16>
    %cst_54 = arith.constant dense<0.000000e+00> : vector<32x128xf32>
    %114 = tpu.matmul %112, %113, %cst_54 {dimension_numbers = #tpu.dot_dimension_numbers<[1], [0], [0], [1], [0, 0, 1, 1], [], []>} : vector<32x128xbf16>, vector<128x128xbf16>, vector<32x128xf32> -> vector<32x128xf32>
    %c0_55 = arith.constant 0 : index
    %c0_56 = arith.constant 0 : index
    %115 = vector.load %arg15[%c0_55, %c0_56] : memref<1x128xf32, #tpu.memory_space<vmem>>, vector<1x128xf32>
    %116 = vector.broadcast %115 : vector<1x128xf32> to vector<32x128xf32>
    %117 = arith.mulf %114, %116 : vector<32x128xf32>
    %c0_57 = arith.constant 0 : index
    %c0_58 = arith.constant 0 : index
    %118 = vector.load %arg16[%c0_57, %c0_58] : memref<1x128xf32, #tpu.memory_space<vmem>>, vector<1x128xf32>
    %119 = vector.broadcast %118 : vector<1x128xf32> to vector<32x128xf32>
    %120 = arith.addf %117, %119 : vector<32x128xf32>
    %cst_59 = arith.constant 0.000000e+00 : f32
    %121 = vector.broadcast %cst_59 : f32 to vector<32x128xf32>
    %122 = arith.maximumf %120, %121 : vector<32x128xf32>
    %123 = vector.shape_cast %122 : vector<32x128xf32> to vector<2x16x128xf32>
    %cst_60 = arith.constant dense<0.000000e+00> : vector<2x128xf32>
    %124 = vector.multi_reduction <add>, %123, %cst_60 [1] : vector<2x16x128xf32> to vector<2x128xf32>
    %125 = vector.shape_cast %124 : vector<2x128xf32> to vector<2x1x128xf32>
    %cst_61 = arith.constant 1.600000e+01 : f32
    %126 = vector.broadcast %cst_61 : f32 to vector<2x1x128xf32>
    %127 = arith.divf %125, %126 : vector<2x1x128xf32>
    %128 = vector.broadcast %127 : vector<2x1x128xf32> to vector<2x16x128xf32>
    %129 = arith.subf %123, %128 : vector<2x16x128xf32>
    %130 = arith.mulf %129, %129 : vector<2x16x128xf32>
    %cst_62 = arith.constant dense<0.000000e+00> : vector<2x128xf32>
    %131 = vector.multi_reduction <add>, %130, %cst_62 [1] : vector<2x16x128xf32> to vector<2x128xf32>
    %132 = vector.shape_cast %131 : vector<2x128xf32> to vector<2x1x128xf32>
    %cst_63 = arith.constant 1.500000e+01 : f32
    %133 = vector.broadcast %cst_63 : f32 to vector<2x1x128xf32>
    %134 = arith.divf %132, %133 : vector<2x1x128xf32>
    %135 = math.sqrt %134 : vector<2x1x128xf32>
    %136 = vector.shape_cast %127 : vector<2x1x128xf32> to vector<2x128xf32>
    %137 = vector.shape_cast %135 : vector<2x1x128xf32> to vector<2x128xf32>
    %138 = tpu.concatenate %136, %137 in 1 : vector<2x128xf32>, vector<2x128xf32> -> vector<2x256xf32>
    %139 = arith.truncf %138 : vector<2x256xf32> to vector<2x256xbf16>
    %c0_64 = arith.constant 0 : index
    %c0_65 = arith.constant 0 : index
    %140 = vector.load %arg17[%c0_64, %c0_65] : memref<256x128xbf16, #tpu.memory_space<vmem>>, vector<256x128xbf16>
    %cst_66 = arith.constant dense<0.000000e+00> : vector<2x128xf32>
    %141 = tpu.matmul %139, %140, %cst_66 {dimension_numbers = #tpu.dot_dimension_numbers<[1], [0], [0], [1], [0, 0, 1, 1], [], []>} : vector<2x256xbf16>, vector<256x128xbf16>, vector<2x128xf32> -> vector<2x128xf32>
    %c0_67 = arith.constant 0 : index
    %c0_68 = arith.constant 0 : index
    %142 = vector.load %arg18[%c0_67, %c0_68] : memref<1x128xf32, #tpu.memory_space<vmem>>, vector<1x128xf32>
    %143 = vector.broadcast %142 : vector<1x128xf32> to vector<2x128xf32>
    %144 = arith.addf %141, %143 : vector<2x128xf32>
    %c0_69 = arith.constant 0 : index
    %c0_70 = arith.constant 0 : index
    %145 = vector.load %arg19[%c0_69, %c0_70] : memref<1x128xf32, #tpu.memory_space<vmem>>, vector<1x128xf32>
    %146 = vector.broadcast %145 : vector<1x128xf32> to vector<2x128xf32>
    %147 = arith.mulf %144, %146 : vector<2x128xf32>
    %c0_71 = arith.constant 0 : index
    %c0_72 = arith.constant 0 : index
    %148 = vector.load %arg20[%c0_71, %c0_72] : memref<1x128xf32, #tpu.memory_space<vmem>>, vector<1x128xf32>
    %149 = vector.broadcast %148 : vector<1x128xf32> to vector<2x128xf32>
    %150 = arith.addf %147, %149 : vector<2x128xf32>
    %c0_73 = arith.constant 0 : index
    %c0_74 = arith.constant 0 : index
    %151 = vector.load %arg24[%c0_73, %c0_74] : memref<2x128xf32, #tpu.memory_space<vmem>>, vector<2x128xf32>
    tpu.vector_store %arg24[%c0_73, %c0_74], %150 {strides = array<i32>} : memref<2x128xf32, #tpu.memory_space<vmem>>, vector<2x128xf32>,
    %cst_75 = arith.constant 0.000000e+00 : f32
    %152 = vector.broadcast %cst_75 : f32 to vector<2x128xf32>
    %153 = arith.maximumf %150, %152 : vector<2x128xf32>
    %154 = arith.truncf %153 : vector<2x128xf32> to vector<2x128xbf16>
    %c0_76 = arith.constant 0 : index
    %c0_77 = arith.constant 0 : index
    %155 = vector.load %arg21[%c0_76, %c0_77] : memref<128x128xbf16, #tpu.memory_space<vmem>>, vector<128x128xbf16>
    %cst_78 = arith.constant dense<0.000000e+00> : vector<2x128xf32>
    %156 = tpu.matmul %154, %155, %cst_78 {dimension_numbers = #tpu.dot_dimension_numbers<[1], [0], [0], [1], [0, 0, 1, 1], [], []>} : vector<2x128xbf16>, vector<128x128xbf16>, vector<2x128xf32> -> vector<2x128xf32>
    %c0_79 = arith.constant 0 : index
    %c0_80 = arith.constant 0 : index
    %157 = vector.load %arg22[%c0_79, %c0_80] : memref<1x128xf32, #tpu.memory_space<vmem>>, vector<1x128xf32>
    %158 = vector.broadcast %157 : vector<1x128xf32> to vector<2x128xf32>
    %159 = arith.addf %156, %158 : vector<2x128xf32>
    %c0_81 = arith.constant 0 : index
    %c0_82 = arith.constant 0 : index
    %160 = vector.load %arg23[%c0_81, %c0_82] : memref<2x128xf32, #tpu.memory_space<vmem>>, vector<2x128xf32>
    tpu.vector_store %arg23[%c0_81, %c0_82], %159 {strides = array<i32>} : memref<2x128xf32, #tpu.memory_space<vmem>>, vector<2x128xf32>,
    return
  }
  func.func @transform_0(%arg0: i32) -> (i32, i32, i32) {
    %c0_i32 = arith.constant 0 : i32
    %c0_i32_0 = arith.constant 0 : i32
    %c0_i32_1 = arith.constant 0 : i32
    return %arg0, %c0_i32, %c0_i32_0 : i32, i32, i32
  }
  func.func @transform_1(%arg0: i32) -> (i32, i32) {
    %c0_i32 = arith.constant 0 : i32
    %c0_i32_0 = arith.constant 0 : i32
    %c0_i32_1 = arith.constant 0 : i32
    return %c0_i32, %c0_i32_0 : i32, i32
  }
  func.func @transform_2(%arg0: i32) -> (i32, i32) {
    %c0_i32 = arith.constant 0 : i32
    %c0_i32_0 = arith.constant 0 : i32
    %c0_i32_1 = arith.constant 0 : i32
    return %c0_i32, %c0_i32_0 : i32, i32
  }
  func.func @transform_3(%arg0: i32) -> (i32, i32) {
    %c0_i32 = arith.constant 0 : i32
    %c0_i32_0 = arith.constant 0 : i32
    %c0_i32_1 = arith.constant 0 : i32
    return %c0_i32, %c0_i32_0 : i32, i32
  }
  func.func @transform_4(%arg0: i32) -> (i32, i32) {
    %c0_i32 = arith.constant 0 : i32
    %c0_i32_0 = arith.constant 0 : i32
    %c0_i32_1 = arith.constant 0 : i32
    return %c0_i32, %c0_i32_0 : i32, i32
  }
  func.func @transform_5(%arg0: i32) -> (i32, i32) {
    %c0_i32 = arith.constant 0 : i32
    %c0_i32_0 = arith.constant 0 : i32
    %c0_i32_1 = arith.constant 0 : i32
    return %c0_i32, %c0_i32_0 : i32, i32
  }
  func.func @transform_6(%arg0: i32) -> (i32, i32) {
    %c0_i32 = arith.constant 0 : i32
    %c0_i32_0 = arith.constant 0 : i32
    %c0_i32_1 = arith.constant 0 : i32
    return %c0_i32, %c0_i32_0 : i32, i32
  }
  func.func @transform_7(%arg0: i32) -> (i32, i32) {
    %c0_i32 = arith.constant 0 : i32
    %c0_i32_0 = arith.constant 0 : i32
    %c0_i32_1 = arith.constant 0 : i32
    return %c0_i32, %c0_i32_0 : i32, i32
  }
  func.func @transform_8(%arg0: i32) -> (i32, i32) {
    %c0_i32 = arith.constant 0 : i32
    %c0_i32_0 = arith.constant 0 : i32
    %c0_i32_1 = arith.constant 0 : i32
    return %c0_i32, %c0_i32_0 : i32, i32
  }
  func.func @transform_9(%arg0: i32) -> (i32, i32) {
    %c0_i32 = arith.constant 0 : i32
    %c0_i32_0 = arith.constant 0 : i32
    %c0_i32_1 = arith.constant 0 : i32
    return %c0_i32, %c0_i32_0 : i32, i32
  }
  func.func @transform_10(%arg0: i32) -> (i32, i32) {
    %c0_i32 = arith.constant 0 : i32
    %c0_i32_0 = arith.constant 0 : i32
    %c0_i32_1 = arith.constant 0 : i32
    return %c0_i32, %c0_i32_0 : i32, i32
  }
  func.func @transform_11(%arg0: i32) -> (i32, i32) {
    %c0_i32 = arith.constant 0 : i32
    %c0_i32_0 = arith.constant 0 : i32
    %c0_i32_1 = arith.constant 0 : i32
    return %c0_i32, %c0_i32_0 : i32, i32
  }
  func.func @transform_12(%arg0: i32) -> (i32, i32) {
    %c0_i32 = arith.constant 0 : i32
    %c0_i32_0 = arith.constant 0 : i32
    %c0_i32_1 = arith.constant 0 : i32
    return %c0_i32, %c0_i32_0 : i32, i32
  }
  func.func @transform_13(%arg0: i32) -> (i32, i32) {
    %c0_i32 = arith.constant 0 : i32
    %c0_i32_0 = arith.constant 0 : i32
    %c0_i32_1 = arith.constant 0 : i32
    return %c0_i32, %c0_i32_0 : i32, i32
  }
  func.func @transform_14(%arg0: i32) -> (i32, i32) {
    %c0_i32 = arith.constant 0 : i32
    %c0_i32_0 = arith.constant 0 : i32
    %c0_i32_1 = arith.constant 0 : i32
    return %c0_i32, %c0_i32_0 : i32, i32
  }
  func.func @transform_15(%arg0: i32) -> (i32, i32) {
    %c0_i32 = arith.constant 0 : i32
    %c0_i32_0 = arith.constant 0 : i32
    %c0_i32_1 = arith.constant 0 : i32
    return %c0_i32, %c0_i32_0 : i32, i32
  }
  func.func @transform_16(%arg0: i32) -> (i32, i32) {
    %c0_i32 = arith.constant 0 : i32
    %c0_i32_0 = arith.constant 0 : i32
    %c0_i32_1 = arith.constant 0 : i32
    return %c0_i32, %c0_i32_0 : i32, i32
  }
  func.func @transform_17(%arg0: i32) -> (i32, i32) {
    %c0_i32 = arith.constant 0 : i32
    %c0_i32_0 = arith.constant 0 : i32
    %c0_i32_1 = arith.constant 0 : i32
    return %c0_i32, %c0_i32_0 : i32, i32
  }
  func.func @transform_18(%arg0: i32) -> (i32, i32) {
    %c0_i32 = arith.constant 0 : i32
    %c0_i32_0 = arith.constant 0 : i32
    %c0_i32_1 = arith.constant 0 : i32
    return %c0_i32, %c0_i32_0 : i32, i32
  }
  func.func @transform_19(%arg0: i32) -> (i32, i32) {
    %c0_i32 = arith.constant 0 : i32
    %c0_i32_0 = arith.constant 0 : i32
    %c0_i32_1 = arith.constant 0 : i32
    return %c0_i32, %c0_i32_0 : i32, i32
  }
  func.func @transform_20(%arg0: i32) -> (i32, i32) {
    %c0_i32 = arith.constant 0 : i32
    %c0_i32_0 = arith.constant 0 : i32
    %c0_i32_1 = arith.constant 0 : i32
    return %c0_i32, %c0_i32_0 : i32, i32
  }
  func.func @transform_21(%arg0: i32) -> (i32, i32) {
    %c0_i32 = arith.constant 0 : i32
    %c0_i32_0 = arith.constant 0 : i32
    %c0_i32_1 = arith.constant 0 : i32
    return %c0_i32, %c0_i32_0 : i32, i32
  }
  func.func @transform_22(%arg0: i32) -> (i32, i32) {
    %c0_i32 = arith.constant 0 : i32
    %c0_i32_0 = arith.constant 0 : i32
    return %arg0, %c0_i32 : i32, i32
  }
  func.func @transform_23(%arg0: i32) -> (i32, i32) {
    %c0_i32 = arith.constant 0 : i32
    %c0_i32_0 = arith.constant 0 : i32
    return %arg0, %c0_i32 : i32, i32
  }
}

</mosaic_0001>

<llo_original>
// kernel: speaker_vector_forward.1
$region0: #{speaker_vector_forward.1}
  #allocation0 [shape = 'u32[]', space=smem, size = 0x4, offset = 0x4, fixed_abs, tag = 'smem constant byte address 0x4 - core index']
  #allocation1 [shape = 'u32[144,128]{1,0:T(1,128)}', space=vmem, size = 0x12000, scoped, tag = 'internal scratch']
  %s0 = inlined_call_operand.vmem [shape: f32[2,16,256], index: 0, kind: input, shape index: {}]
  %s1 = inlined_call_operand.vmem [shape: f32[256,256], index: 1, kind: input, shape index: {}]
  %s2 = inlined_call_operand.vmem [shape: f32[128,128], index: 2, kind: input, shape index: {}]
  %s3 = inlined_call_operand.vmem [shape: bf16[128,128], index: 3, kind: input, shape index: {}]
  %s4 = inlined_call_operand.vmem [shape: bf16[128,128], index: 4, kind: input, shape index: {}]
  %s5 = inlined_call_operand.vmem [shape: bf16[128,128], index: 5, kind: input, shape index: {}]
  %s6 = inlined_call_operand.vmem [shape: f32[1,128], index: 6, kind: input, shape index: {}]
  %s7 = inlined_call_operand.vmem [shape: f32[1,128], index: 7, kind: input, shape index: {}]
  %s8 = inlined_call_operand.vmem [shape: bf16[128,128], index: 8, kind: input, shape index: {}]
  %s9 = inlined_call_operand.vmem [shape: bf16[128,128], index: 9, kind: input, shape index: {}]
  %s10 = inlined_call_operand.vmem [shape: bf16[128,128], index: 10, kind: input, shape index: {}]
  %s11 = inlined_call_operand.vmem [shape: f32[1,128], index: 11, kind: input, shape index: {}]
  %s12 = inlined_call_operand.vmem [shape: f32[1,128], index: 12, kind: input, shape index: {}]
  %s13 = inlined_call_operand.vmem [shape: bf16[128,128], index: 13, kind: input, shape index: {}]
  %s14 = inlined_call_operand.vmem [shape: f32[1,128], index: 14, kind: input, shape index: {}]
  %s15 = inlined_call_operand.vmem [shape: f32[1,128], index: 15, kind: input, shape index: {}]
  %s16 = inlined_call_operand.vmem [shape: bf16[256,128], index: 16, kind: input, shape index: {}]
  %s17 = inlined_call_operand.vmem [shape: f32[1,128], index: 17, kind: input, shape index: {}]
  %s18 = inlined_call_operand.vmem [shape: f32[1,128], index: 18, kind: input, shape index: {}]
  %s19 = inlined_call_operand.vmem [shape: f32[1,128], index: 19, kind: input, shape index: {}]
  %s20 = inlined_call_operand.vmem [shape: bf16[128,128], index: 20, kind: input, shape index: {}]
  %s21 = inlined_call_operand.vmem [shape: f32[1,128], index: 21, kind: input, shape index: {}]
  %s22 = inlined_call_operand.hbm [shape: f32[2,128], index: 22, kind: output, shape index: {0}]
  %s23 = inlined_call_operand.hbm [shape: f32[2,128], index: 23, kind: output, shape index: {1}]
  %24 = xla_tuple %s22, %s23
  %s25 = sld [smem:[#allocation0]]
  $region106: #{speaker_vector_forward.1} parent=0
    _
  %s27 = ssub.s32 1, %s25
  %s28 = scalar_select 0, %s27, %s25
  $region1: #{speaker_vector_forward.1} parent=0
    #allocation2 [shape = 'u8[1024]{0}', space=vmem, size = 0x400, scoped, tag = 'output window, operand 0, single buffered']
    #allocation3 [shape = 's32[1]{0}', space=sflag, size = 0x4, scoped, tag = 'scoped memory for speaker_vector_forward.1']
    #allocation4 [shape = 'u8[1024]{0}', space=vmem, size = 0x400, scoped, tag = 'output window, operand 1, single buffered']
    #allocation5 [shape = 's32[1]{0}', space=sflag, size = 0x4, scoped, tag = 'scoped memory for speaker_vector_forward.1']
    %29 = vsyncpa [#allocation3], 0
    %30 = vsyncpa [#allocation5], 0
    // Predicated region
    $region2: #{speaker_vector_forward.1} parent=1 // pred_check
      _
    $region3: #{speaker_vector_forward.1} parent=1 // pred_check_branch
      %32 = sbr.rel (0) target = $region5
    $region4: #{speaker_vector_forward.1} parent=1 // pred_region
      _
    $region5: #{speaker_vector_forward.1} parent=1 // pred_fallthru
      _
    // Predicated region
    $region6: #{speaker_vector_forward.1} parent=1 // pred_check
      _
    $region7: #{speaker_vector_forward.1} parent=1 // pred_check_branch
      %34 = sbr.rel (0) target = $region9
    $region8: #{speaker_vector_forward.1} parent=1 // pred_region
      _
    $region9: #{speaker_vector_forward.1} parent=1 // pred_fallthru
      _
    // Predicated region
    $region10: #{speaker_vector_forward.1} parent=1 // pred_check
      _
    $region11: #{speaker_vector_forward.1} parent=1 // pred_check_branch
      %36 = sbr.rel (0) target = $region13
    $region12: #{speaker_vector_forward.1} parent=1 // pred_region
      _
    $region13: #{speaker_vector_forward.1} parent=1 // pred_fallthru
      _
    // Predicated region
    $region14: #{speaker_vector_forward.1} parent=1 // pred_check
      _
    $region15: #{speaker_vector_forward.1} parent=1 // pred_check_branch
      %38 = sbr.rel (0) target = $region17
    $region16: #{speaker_vector_forward.1} parent=1 // pred_region
      _
    $region17: #{speaker_vector_forward.1} parent=1 // pred_fallthru
      _
    // Predicated region
    $region18: #{speaker_vector_forward.1} parent=1 // pred_check
      _
    $region19: #{speaker_vector_forward.1} parent=1 // pred_check_branch
      %40 = sbr.rel (0) target = $region21
    $region20: #{speaker_vector_forward.1} parent=1 // pred_region
      _
    $region21: #{speaker_vector_forward.1} parent=1 // pred_fallthru
      _
    // Predicated region
    $region22: #{speaker_vector_forward.1} parent=1 // pred_check
      _
    $region23: #{speaker_vector_forward.1} parent=1 // pred_check_branch
      %42 = sbr.rel (0) target = $region25
    $region24: #{speaker_vector_forward.1} parent=1 // pred_region
      _
    $region25: #{speaker_vector_forward.1} parent=1 // pred_fallthru
      _
    // Predicated region
    $region26: #{speaker_vector_forward.1} parent=1 // pred_check
      _
    $region27: #{speaker_vector_forward.1} parent=1 // pred_check_branch
      %44 = sbr.rel (0) target = $region29
    $region28: #{speaker_vector_forward.1} parent=1 // pred_region
      _
    $region29: #{speaker_vector_forward.1} parent=1 // pred_fallthru
      _
    // Predicated region
    $region30: #{speaker_vector_forward.1} parent=1 // pred_check
      _
    $region31: #{speaker_vector_forward.1} parent=1 // pred_check_branch
      %46 = sbr.rel (0) target = $region33
    $region32: #{speaker_vector_forward.1} parent=1 // pred_region
      _
    $region33: #{speaker_vector_forward.1} parent=1 // pred_fallthru
      _
    // Predicated region
    $region34: #{speaker_vector_forward.1} parent=1 // pred_check
      _
    $region35: #{speaker_vector_forward.1} parent=1 // pred_check_branch
      %48 = sbr.rel (0) target = $region37
    $region36: #{speaker_vector_forward.1} parent=1 // pred_region
      _
    $region37: #{speaker_vector_forward.1} parent=1 // pred_fallthru
      _
    // Predicated region
    $region38: #{speaker_vector_forward.1} parent=1 // pred_check
      _
    $region39: #{speaker_vector_forward.1} parent=1 // pred_check_branch
      %50 = sbr.rel (0) target = $region41
    $region40: #{speaker_vector_forward.1} parent=1 // pred_region
      _
    $region41: #{speaker_vector_forward.1} parent=1 // pred_fallthru
      _
    // Predicated region
    $region42: #{speaker_vector_forward.1} parent=1 // pred_check
      _
    $region43: #{speaker_vector_forward.1} parent=1 // pred_check_branch
      %52 = sbr.rel (0) target = $region45
    $region44: #{speaker_vector_forward.1} parent=1 // pred_region
      _
    $region45: #{speaker_vector_forward.1} parent=1 // pred_fallthru
      _
    // Predicated region
    $region46: #{speaker_vector_forward.1} parent=1 // pred_check
      _
    $region47: #{speaker_vector_forward.1} parent=1 // pred_check_branch
      %54 = sbr.rel (0) target = $region49
    $region48: #{speaker_vector_forward.1} parent=1 // pred_region
      _
    $region49: #{speaker_vector_forward.1} parent=1 // pred_fallthru
      _
    // Predicated region
    $region50: #{speaker_vector_forward.1} parent=1 // pred_check
      _
    $region51: #{speaker_vector_forward.1} parent=1 // pred_check_branch
      %56 = sbr.rel (0) target = $region53
    $region52: #{speaker_vector_forward.1} parent=1 // pred_region
      _
    $region53: #{speaker_vector_forward.1} parent=1 // pred_fallthru
      _
    // Predicated region
    $region54: #{speaker_vector_forward.1} parent=1 // pred_check
      _
    $region55: #{speaker_vector_forward.1} parent=1 // pred_check_branch
      %58 = sbr.rel (0) target = $region57
    $region56: #{speaker_vector_forward.1} parent=1 // pred_region
      _
    $region57: #{speaker_vector_forward.1} parent=1 // pred_fallthru
      _
    // Predicated region
    $region58: #{speaker_vector_forward.1} parent=1 // pred_check
      _
    $region59: #{speaker_vector_forward.1} parent=1 // pred_check_branch
      %60 = sbr.rel (0) target = $region61
    $region60: #{speaker_vector_forward.1} parent=1 // pred_region
      _
    $region61: #{speaker_vector_forward.1} parent=1 // pred_fallthru
      _
    // Predicated region
    $region62: #{speaker_vector_forward.1} parent=1 // pred_check
      _
    $region63: #{speaker_vector_forward.1} parent=1 // pred_check_branch
      %62 = sbr.rel (0) target = $region65
    $region64: #{speaker_vector_forward.1} parent=1 // pred_region
      _
    $region65: #{speaker_vector_forward.1} parent=1 // pred_fallthru
      _
    // Predicated region
    $region66: #{speaker_vector_forward.1} parent=1 // pred_check
      _
    $region67: #{speaker_vector_forward.1} parent=1 // pred_check_branch
      %64 = sbr.rel (0) target = $region69
    $region68: #{speaker_vector_forward.1} parent=1 // pred_region
      _
    $region69: #{speaker_vector_forward.1} parent=1 // pred_fallthru
      _
    // Predicated region
    $region70: #{speaker_vector_forward.1} parent=1 // pred_check
      _
    $region71: #{speaker_vector_forward.1} parent=1 // pred_check_branch
      %66 = sbr.rel (0) target = $region73
    $region72: #{speaker_vector_forward.1} parent=1 // pred_region
      _
    $region73: #{speaker_vector_forward.1} parent=1 // pred_fallthru
      _
    // Predicated region
    $region74: #{speaker_vector_forward.1} parent=1 // pred_check
      _
    $region75: #{speaker_vector_forward.1} parent=1 // pred_check_branch
      %68 = sbr.rel (0) target = $region77
    $region76: #{speaker_vector_forward.1} parent=1 // pred_region
      _
    $region77: #{speaker_vector_forward.1} parent=1 // pred_fallthru
      _
    // Predicated region
    $region78: #{speaker_vector_forward.1} parent=1 // pred_check
      _
    $region79: #{speaker_vector_forward.1} parent=1 // pred_check_branch
      %70 = sbr.rel (0) target = $region81
    $region80: #{speaker_vector_forward.1} parent=1 // pred_region
      _
    $region81: #{speaker_vector_forward.1} parent=1 // pred_fallthru
      _
    // Predicated region
    $region82: #{speaker_vector_forward.1} parent=1 // pred_check
      _
    $region83: #{speaker_vector_forward.1} parent=1 // pred_check_branch
      %72 = sbr.rel (0) target = $region85
    $region84: #{speaker_vector_forward.1} parent=1 // pred_region
      _
    $region85: #{speaker_vector_forward.1} parent=1 // pred_fallthru
      _
    // Predicated region
    $region86: #{speaker_vector_forward.1} parent=1 // pred_check
      _
    $region87: #{speaker_vector_forward.1} parent=1 // pred_check_branch
      %74 = sbr.rel (0) target = $region89
    $region88: #{speaker_vector_forward.1} parent=1 // pred_region
      _
    $region89: #{speaker_vector_forward.1} parent=1 // pred_fallthru
      _
    %v76 = vld [vmem:[%s0] sm:$0xff]
    %v77 = vld [vmem:[%s0 + $0x8] sm:$0xff]
    %v78 = vld [vmem:[%s0 + $0x10] sm:$0xff]
    %v79 = vld [vmem:[%s0 + $0x18] sm:$0xff]
    %v80 = vld [vmem:[%s0 + $0x20] sm:$0xff]
    %v81 = vld [vmem:[%s0 + $0x28] sm:$0xff]
    %v82 = vld [vmem:[%s0 + $0x30] sm:$0xff]
    %v83 = vld [vmem:[%s0 + $0x38] sm:$0xff]
    %v84 = vld [vmem:[%s1] sm:$0xff]
    %v85 = vld [vmem:[%s1 + $0x8] sm:$0xff]
    %v86 = vld [vmem:[%s1 + $0x10] sm:$0xff]
    %v87 = vld [vmem:[%s1 + $0x18] sm:$0xff]
    %v88 = vld [vmem:[%s1 + $0x20] sm:$0xff]
    %v89 = vld [vmem:[%s1 + $0x28] sm:$0xff]
    %v90 = vld [vmem:[%s1 + $0x30] sm:$0xff]
    %v91 = vld [vmem:[%s1 + $0x38] sm:$0xff]
    %v92 = vld [vmem:[%s1 + $0x40] sm:$0xff]
    %v93 = vld [vmem:[%s1 + $0x48] sm:$0xff]
    %v94 = vld [vmem:[%s1 + $0x50] sm:$0xff]
    %v95 = vld [vmem:[%s1 + $0x58] sm:$0xff]
    %v96 = vld [vmem:[%s1 + $0x60] sm:$0xff]
    %v97 = vld [vmem:[%s1 + $0x68] sm:$0xff]
    %v98 = vld [vmem:[%s1 + $0x70] sm:$0xff]
    %v99 = vld [vmem:[%s1 + $0x78] sm:$0xff]
    %v100 = vld [vmem:[%s1 + $0x80] sm:$0xff]
    %v101 = vld [vmem:[%s1 + $0x88] sm:$0xff]
    %v102 = vld [vmem:[%s1 + $0x90] sm:$0xff]
    %v103 = vld [vmem:[%s1 + $0x98] sm:$0xff]
    %v104 = vld [vmem:[%s1 + $0xa0] sm:$0xff]
    %v105 = vld [vmem:[%s1 + $0xa8] sm:$0xff]
    %v106 = vld [vmem:[%s1 + $0xb0] sm:$0xff]
    %v107 = vld [vmem:[%s1 + $0xb8] sm:$0xff]
    %v108 = vld [vmem:[%s1 + $0xc0] sm:$0xff]
    %v109 = vld [vmem:[%s1 + $0xc8] sm:$0xff]
    %v110 = vld [vmem:[%s1 + $0xd0] sm:$0xff]
    %v111 = vld [vmem:[%s1 + $0xd8] sm:$0xff]
    %v112 = vld [vmem:[%s1 + $0xe0] sm:$0xff]
    %v113 = vld [vmem:[%s1 + $0xe8] sm:$0xff]
    %v114 = vld [vmem:[%s1 + $0xf0] sm:$0xff]
    %v115 = vld [vmem:[%s1 + $0xf8] sm:$0xff]
    %v116 = vld [vmem:[%s1 + $0x100] sm:$0xff]
    %v117 = vld [vmem:[%s1 + $0x108] sm:$0xff]
    %v118 = vld [vmem:[%s1 + $0x110] sm:$0xff]
    %v119 = vld [vmem:[%s1 + $0x118] sm:$0xff]
    %v120 = vld [vmem:[%s1 + $0x120] sm:$0xff]
    %v121 = vld [vmem:[%s1 + $0x128] sm:$0xff]
    %v122 = vld [vmem:[%s1 + $0x130] sm:$0xff]
    %v123 = vld [vmem:[%s1 + $0x138] sm:$0xff]
    %v124 = vld [vmem:[%s1 + $0x140] sm:$0xff]
    %v125 = vld [vmem:[%s1 + $0x148] sm:$0xff]
    %v126 = vld [vmem:[%s1 + $0x150] sm:$0xff]
    %v127 = vld [vmem:[%s1 + $0x158] sm:$0xff]
    %v128 = vld [vmem:[%s1 + $0x160] sm:$0xff]
    %v129 = vld [vmem:[%s1 + $0x168] sm:$0xff]
    %v130 = vld [vmem:[%s1 + $0x170] sm:$0xff]
    %v131 = vld [vmem:[%s1 + $0x178] sm:$0xff]
    %v132 = vld [vmem:[%s1 + $0x180] sm:$0xff]
    %v133 = vld [vmem:[%s1 + $0x188] sm:$0xff]
    %v134 = vld [vmem:[%s1 + $0x190] sm:$0xff]
    %v135 = vld [vmem:[%s1 + $0x198] sm:$0xff]
    %v136 = vld [vmem:[%s1 + $0x1a0] sm:$0xff]
    %v137 = vld [vmem:[%s1 + $0x1a8] sm:$0xff]
    %v138 = vld [vmem:[%s1 + $0x1b0] sm:$0xff]
    %v139 = vld [vmem:[%s1 + $0x1b8] sm:$0xff]
    %v140 = vld [vmem:[%s1 + $0x1c0] sm:$0xff]
    %v141 = vld [vmem:[%s1 + $0x1c8] sm:$0xff]
    %v142 = vld [vmem:[%s1 + $0x1d0] sm:$0xff]
    %v143 = vld [vmem:[%s1 + $0x1d8] sm:$0xff]
    %v144 = vld [vmem:[%s1 + $0x1e0] sm:$0xff]
    %v145 = vld [vmem:[%s1 + $0x1e8] sm:$0xff]
    %v146 = vld [vmem:[%s1 + $0x1f0] sm:$0xff]
    %v147 = vld [vmem:[%s1 + $0x1f8] sm:$0xff]
    %148 = vmatprep.subr.mxu0 %v85
    %149 = vmatpush1.msra.mxu0 %v84
    %150 = vmatprep.subr.mxu0 %v87
    %151 = vmatpush1.msra.mxu0 %v86
    %152 = vmatprep.subr.mxu0 %v89
    %153 = vmatpush1.msra.mxu0 %v88
    %154 = vmatprep.subr.mxu0 %v91
    %155 = vmatpush1.msra.mxu0 %v90
    %156 = vmatprep.subr.mxu0 %v93
    %157 = vmatpush1.msra.mxu0 %v92
    %158 = vmatprep.subr.mxu0 %v95
    %159 = vmatpush1.msra.mxu0 %v94
    %160 = vmatprep.subr.mxu0 %v97
    %161 = vmatpush1.msra.mxu0 %v96
    %162 = vmatprep.subr.mxu0 %v99
    %163 = vmatpush1.msra.mxu0 %v98
    %164 = vmatprep.subr.mxu0 %v101
    %165 = vmatpush1.msra.mxu0 %v100
    %166 = vmatprep.subr.mxu0 %v103
    %167 = vmatpush1.msra.mxu0 %v102
    %168 = vmatprep.subr.mxu0 %v105
    %169 = vmatpush1.msra.mxu0 %v104
    %170 = vmatprep.subr.mxu0 %v107
    %171 = vmatpush1.msra.mxu0 %v106
    %172 = vmatprep.subr.mxu0 %v109
    %173 = vmatpush1.msra.mxu0 %v108
    %174 = vmatprep.subr.mxu0 %v111
    %175 = vmatpush1.msra.mxu0 %v110
    %176 = vmatprep.subr.mxu0 %v113
    %177 = vmatpush1.msra.mxu0 %v112
    %178 = vmatprep.subr.mxu0 %v115
    %179 = vmatpush1.msra.mxu0 %v114
    %180 = vmatprep.subr.mxu0 %v117
    %181 = vmatpush1.msra.mxu0 %v116
    %182 = vmatprep.subr.mxu0 %v119
    %183 = vmatpush1.msra.mxu0 %v118
    %184 = vmatprep.subr.mxu0 %v121
    %185 = vmatpush1.msra.mxu0 %v120
    %186 = vmatprep.subr.mxu0 %v123
    %187 = vmatpush1.msra.mxu0 %v122
    %188 = vmatprep.subr.mxu0 %v125
    %189 = vmatpush1.msra.mxu0 %v124
    %190 = vmatprep.subr.mxu0 %v127
    %191 = vmatpush1.msra.mxu0 %v126
    %192 = vmatprep.subr.mxu0 %v129
    %193 = vmatpush1.msra.mxu0 %v128
    %194 = vmatprep.subr.mxu0 %v131
    %195 = vmatpush1.msra.mxu0 %v130
    %196 = vmatprep.subr.mxu0 %v133
    %197 = vmatpush1.msra.mxu0 %v132
    %198 = vmatprep.subr.mxu0 %v135
    %199 = vmatpush1.msra.mxu0 %v134
    %200 = vmatprep.subr.mxu0 %v137
    %201 = vmatpush1.msra.mxu0 %v136
    %202 = vmatprep.subr.mxu0 %v139
    %203 = vmatpush1.msra.mxu0 %v138
    %204 = vmatprep.subr.mxu0 %v141
    %205 = vmatpush1.msra.mxu0 %v140
    %206 = vmatprep.subr.mxu0 %v143
    %207 = vmatpush1.msra.mxu0 %v142
    %208 = vmatprep.subr.mxu0 %v145
    %209 = vmatpush1.msra.mxu0 %v144
    %210 = vmatprep.subr.mxu0 %v147
    %211 = vmatpush1.msra.mxu0 %v146
    %212 = vmatprep.mubr.f32.mxu0 %v77
    %213 = vmatmul.mubr.f32.gmra.mrb[0].mxu0 %v76
    %v214 = vpop.f32.mrb[0].mxu0
    %v215 = vadd.f32 0.0, %v214
    %v216 = vpop.f32.mrb[0].mxu0
    %v217 = vadd.f32 0.0, %v216
    %218 = vmatprep.mubr.f32.mxu0 %v79
    %219 = vmatmul.mubr.f32.gmra.mrb[0].mxu0 %v78
    %v220 = vpop.f32.mrb[0].mxu0
    %v221 = vadd.f32 0.0, %v220
    %v222 = vpop.f32.mrb[0].mxu0
    %v223 = vadd.f32 0.0, %v222
    %224 = vmatprep.mubr.f32.mxu0 %v81
    %225 = vmatmul.mubr.f32.gmra.mrb[0].mxu0 %v80
    %v226 = vpop.f32.mrb[0].mxu0
    %v227 = vadd.f32 0.0, %v226
    %v228 = vpop.f32.mrb[0].mxu0
    %v229 = vadd.f32 0.0, %v228
    %230 = vmatprep.mubr.f32.mxu0 %v83
    %231 = vmatmul.mubr.f32.gmra.mrb[0].mxu0 %v82
    %v232 = vpop.f32.mrb[0].mxu0
    %v233 = vadd.f32 0.0, %v232
    %v234 = vpop.f32.mrb[0].mxu0
    %v235 = vadd.f32 0.0, %v234
    %236 = vdwg.mxu0
    %v237 = vmul.f32 %v215, %v215
    %v238 = vmul.f32 %v221, %v221
    %v239 = vmul.f32 %v227, %v227
    %v240 = vmul.f32 %v233, %v233
    %v241 = vmul.f32 %v217, %v217
    %v242 = vmul.f32 %v223, %v223
    %v243 = vmul.f32 %v229, %v229
    %v244 = vmul.f32 %v235, %v235
    %v245 = vadd.f32 %v237, %v241
    %v246 = vadd.f32 %v238, %v242
    %v247 = vadd.f32 %v239, %v243
    %v248 = vadd.f32 %v240, %v244
    %v249 = vld [vmem:[%s2] sm:$0xff]
    %v250 = vld [vmem:[%s2 + $0x8] sm:$0xff]
    %v251 = vld [vmem:[%s2 + $0x10] sm:$0xff]
    %v252 = vld [vmem:[%s2 + $0x18] sm:$0xff]
    %v253 = vld [vmem:[%s2 + $0x20] sm:$0xff]
    %v254 = vld [vmem:[%s2 + $0x28] sm:$0xff]
    %v255 = vld [vmem:[%s2 + $0x30] sm:$0xff]
    %v256 = vld [vmem:[%s2 + $0x38] sm:$0xff]
    %v257 = vld [vmem:[%s2 + $0x40] sm:$0xff]
    %v258 = vld [vmem:[%s2 + $0x48] sm:$0xff]
    %v259 = vld [vmem:[%s2 + $0x50] sm:$0xff]
    %v260 = vld [vmem:[%s2 + $0x58] sm:$0xff]
    %v261 = vld [vmem:[%s2 + $0x60] sm:$0xff]
    %v262 = vld [vmem:[%s2 + $0x68] sm:$0xff]
    %v263 = vld [vmem:[%s2 + $0x70] sm:$0xff]
    %v264 = vld [vmem:[%s2 + $0x78] sm:$0xff]
    %265 = vmatprep.subr.mxu0 0.0
    %266 = vmatpush1.msra.mxu0 %v249
    %267 = vmatprep.subr.mxu0 0.0
    %268 = vmatpush1.msra.mxu0 %v250
    %269 = vmatprep.subr.mxu0 0.0
    %270 = vmatpush1.msra.mxu0 %v251
    %271 = vmatprep.subr.mxu0 0.0
    %272 = vmatpush1.msra.mxu0 %v252
    %273 = vmatprep.subr.mxu0 0.0
    %274 = vmatpush1.msra.mxu0 %v253
    %275 = vmatprep.subr.mxu0 0.0
    %276 = vmatpush1.msra.mxu0 %v254
    %277 = vmatprep.subr.mxu0 0.0
    %278 = vmatpush1.msra.mxu0 %v255
    %279 = vmatprep.subr.mxu0 0.0
    %280 = vmatpush1.msra.mxu0 %v256
    %281 = vmatprep.subr.mxu0 0.0
    %282 = vmatpush1.msra.mxu0 %v257
    %283 = vmatprep.subr.mxu0 0.0
    %284 = vmatpush1.msra.mxu0 %v258
    %285 = vmatprep.subr.mxu0 0.0
    %286 = vmatpush1.msra.mxu0 %v259
    %287 = vmatprep.subr.mxu0 0.0
    %288 = vmatpush1.msra.mxu0 %v260
    %289 = vmatprep.subr.mxu0 0.0
    %290 = vmatpush1.msra.mxu0 %v261
    %291 = vmatprep.subr.mxu0 0.0
    %292 = vmatpush1.msra.mxu0 %v262
    %293 = vmatprep.subr.mxu0 0.0
    %294 = vmatpush1.msra.mxu0 %v263
    %295 = vmatprep.subr.mxu0 0.0
    %296 = vmatpush1.msra.mxu0 %v264
    %297 = vmatprep.subr.mxu0 0.0
    %298 = vmatpush1.msra.mxu0 0.0
    %299 = vmatprep.subr.mxu0 0.0
    %300 = vmatpush1.msra.mxu0 0.0
    %301 = vmatprep.subr.mxu0 0.0
    %302 = vmatpush1.msra.mxu0 0.0
    %303 = vmatprep.subr.mxu0 0.0
    %304 = vmatpush1.msra.mxu0 0.0
    %305 = vmatprep.subr.mxu0 0.0
    %306 = vmatpush1.msra.mxu0 0.0
    %307 = vmatprep.subr.mxu0 0.0
    %308 = vmatpush1.msra.mxu0 0.0
    %309 = vmatprep.subr.mxu0 0.0
    %310 = vmatpush1.msra.mxu0 0.0
    %311 = vmatprep.subr.mxu0 0.0
    %312 = vmatpush1.msra.mxu0 0.0
    %313 = vmatprep.subr.mxu0 0.0
    %314 = vmatpush1.msra.mxu0 0.0
    %315 = vmatprep.subr.mxu0 0.0
    %316 = vmatpush1.msra.mxu0 0.0
    %317 = vmatprep.subr.mxu0 0.0
    %318 = vmatpush1.msra.mxu0 0.0
    %319 = vmatprep.subr.mxu0 0.0
    %320 = vmatpush1.msra.mxu0 0.0
    %321 = vmatprep.subr.mxu0 0.0
    %322 = vmatpush1.msra.mxu0 0.0
    %323 = vmatprep.subr.mxu0 0.0
    %324 = vmatpush1.msra.mxu0 0.0
    %325 = vmatprep.subr.mxu0 0.0
    %326 = vmatpush1.msra.mxu0 0.0
    %327 = vmatprep.subr.mxu0 0.0
    %328 = vmatpush1.msra.mxu0 0.0
    %329 = vmatprep.mubr.f32.mxu0 0.0
    %330 = vmatmul.mubr.f32.gmra.mrb[0].mxu0 %v245
    %v331 = vpop.f32.mrb[0].mxu0
    %v332 = vadd.f32 5.9604645e-08, %v331
    %v333 = vpop.f32.mrb[0].mxu0
    %334 = vmatprep.mubr.f32.mxu0 0.0
    %335 = vmatmul.mubr.f32.gmra.mrb[0].mxu0 %v246
    %v336 = vpop.f32.mrb[0].mxu0
    %v337 = vadd.f32 5.9604645e-08, %v336
    %v338 = vpop.f32.mrb[0].mxu0
    %339 = vmatprep.mubr.f32.mxu0 0.0
    %340 = vmatmul.mubr.f32.gmra.mrb[0].mxu0 %v247
    %v341 = vpop.f32.mrb[0].mxu0
    %v342 = vadd.f32 5.9604645e-08, %v341
    %v343 = vpop.f32.mrb[0].mxu0
    %344 = vmatprep.mubr.f32.mxu0 0.0
    %345 = vmatmul.mubr.f32.gmra.mrb[0].mxu0 %v248
    %v346 = vpop.f32.mrb[0].mxu0
    %v347 = vadd.f32 5.9604645e-08, %v346
    %v348 = vpop.f32.mrb[0].mxu0
    %349 = vdwg.mxu0
    %v350 = vlog2.pop %v332
    %v351 = vmul.f32 %v350, 0.6931472
    %v352 = vlog2.pop %v337
    %v353 = vmul.f32 %v352, 0.6931472
    %v354 = vlog2.pop %v342
    %v355 = vmul.f32 %v354, 0.6931472
    %v356 = vlog2.pop %v347
    %v357 = vmul.f32 %v356, 0.6931472
    %v358 = vadd.f32 %v351, %v353
    %v359 = vrot.slane %v358, 4
    %v360 = vadd.f32 %v358, %v359
    %v361 = vrot.slane %v360, 2
    %v362 = vadd.f32 %v360, %v361
    %v363 = vrot.slane %v362, 1
    %v364 = vadd.f32 %v362, %v363
    %v365 = vadd.f32 %v355, %v357
    %v366 = vrot.slane %v365, 4
    %v367 = vadd.f32 %v365, %v366
    %v368 = vrot.slane %v367, 2
    %v369 = vadd.f32 %v367, %v368
    %v370 = vrot.slane %v369, 1
    %v371 = vadd.f32 %v369, %v370
    %v372 = vrcp.pop 16.0
    %v373 = vmul.f32 %v364, %v372
    %v374 = vmul.f32 %v371, %v372
    %v375 = vsub.f32 %v351, %v373
    %v376 = vsub.f32 %v353, %v373
    %v377 = vsub.f32 %v355, %v374
    %v378 = vsub.f32 %v357, %v374
    %v379 = vmul.f32 %v375, %v375
    %v380 = vmul.f32 %v376, %v376
    %v381 = vmul.f32 %v377, %v377
    %v382 = vmul.f32 %v378, %v378
    %v383 = vadd.f32 %v379, %v380
    %v384 = vrot.slane %v383, 4
    %v385 = vadd.f32 %v383, %v384
    %v386 = vrot.slane %v385, 2
    %v387 = vadd.f32 %v385, %v386
    %v388 = vrot.slane %v387, 1
    %v389 = vadd.f32 %v387, %v388
    %v390 = vadd.f32 %v381, %v382
    %v391 = vrot.slane %v390, 4
    %v392 = vadd.f32 %v390, %v391
    %v393 = vrot.slane %v392, 2
    %v394 = vadd.f32 %v392, %v393
    %v395 = vrot.slane %v394, 1
    %v396 = vadd.f32 %v394, %v395
    %v397 = vrcp.pop 15.0
    %v398 = vmul.f32 %v389, %v397
    %v399 = vmul.f32 %v396, %v397
    %v400 = vrsqrt.pop %v398
    %v401 = vmul.f32 %v398, %v400
    %vm402 = vcmp.eq.f32.partialorder %v398, inf
    %v403 = vsel %vm402, %v398, %v401
    %vm404 = vcmp.eq.f32.partialorder %v398, 0.0
    %v405 = vand.u32 %v398, 2147483648
    %v406 = vsel %vm404, %v405, %v403
    %v407 = vrsqrt.pop %v399
    %v408 = vmul.f32 %v399, %v407
    %vm409 = vcmp.eq.f32.partialorder %v399, inf
    %v410 = vsel %vm409, %v399, %v408
    %vm411 = vcmp.eq.f32.partialorder %v399, 0.0
    %v412 = vand.u32 %v399, 2147483648
    %v413 = vsel %vm411, %v412, %v410
    %v414 = vadd.f32 %v406, 1e-05
    %v415 = vadd.f32 %v413, 1e-05
    %v416 = vrcp.pop %v414
    %v417 = vrcp.pop %v415
    %v418 = vmul.f32 %v375, %v416
    %v419 = vmul.f32 %v376, %v416
    %v420 = vmul.f32 %v377, %v417
    %v421 = vmul.f32 %v378, %v417
    %v422 = vlaneseq
    %v423 = vshrl.u32 %v422, 7
    %v424 = vadd.s32 %v423, 8
    %v425 = vadd.s32 %v423, 16
    %v426 = vadd.s32 %v423, 24
    %vm427 = vcmp.lt.s32.totalorder %v423, 0
    %v428 = vsub.s32 0, %v423
    %v429 = vsel %vm427, %v428, %v423
    %v430 = vshrl.u32 %v429, 4
    %v431 = vand.u32 %v429, 15
    %v432 = vsub.s32 0, %v431
    %v433 = vsel %vm427, %v432, %v431
    %vm434 = vcmp.lt.s32.totalorder %v424, 0
    %v435 = vsub.s32 0, %v424
    %v436 = vsel %vm434, %v435, %v424
    %v437 = vshrl.u32 %v436, 4
    %v438 = vand.u32 %v436, 15
    %v439 = vsub.s32 0, %v438
    %v440 = vsel %vm434, %v439, %v438
    %vm441 = vcmp.lt.s32.totalorder %v425, 0
    %v442 = vsub.s32 0, %v425
    %v443 = vsel %vm441, %v442, %v425
    %v444 = vshrl.u32 %v443, 4
    %v445 = vand.u32 %v443, 15
    %v446 = vsub.s32 0, %v445
    %v447 = vsel %vm441, %v446, %v445
    %vm448 = vcmp.lt.s32.totalorder %v426, 0
    %v449 = vsub.s32 0, %v426
    %v450 = vsel %vm448, %v449, %v426
    %v451 = vshrl.u32 %v450, 4
    %v452 = vand.u32 %v450, 15
    %v453 = vsub.s32 0, %v452
    %v454 = vsel %vm448, %v453, %v452
    %vm455 = vcmp.ne.s32.totalorder %v433, 0
    %vm456 = vcmp.ne.s32.totalorder %v440, 0
    %vm457 = vcmp.ne.s32.totalorder %v447, 0
    %vm458 = vcmp.ne.s32.totalorder %v454, 0
    %vm459 = vcmp.lt.s32.totalorder %v433, 0
    %vm460 = vcmp.lt.s32.totalorder %v440, 0
    %vm461 = vcmp.lt.s32.totalorder %v447, 0
    %vm462 = vcmp.lt.s32.totalorder %v454, 0
    %vm463 = vmand %vm459, %vm455
    %vm464 = vmand %vm460, %vm456
    %vm465 = vmand %vm461, %vm457
    %vm466 = vmand %vm462, %vm458
    %v467 = vadd.s32 %v433, 16
    %v468 = vadd.s32 %v440, 16
    %v469 = vadd.s32 %v447, 16
    %v470 = vadd.s32 %v454, 16
    %v471 = vsel %vm463, %v467, %v433
    %v472 = vsel %vm464, %v468, %v440
    %v473 = vsel %vm465, %v469, %v447
    %v474 = vsel %vm466, %v470, %v454
    %vm475 = vcmp.eq.s32.totalorder %v471, 0
    %vm476 = vcmp.eq.s32.totalorder %v472, 0
    %vm477 = vcmp.eq.s32.totalorder %v473, 0
    %vm478 = vcmp.eq.s32.totalorder %v474, 0
    %vm479 = vcmp.eq.s32.totalorder %v471, 15
    %vm480 = vcmp.eq.s32.totalorder %v472, 15
    %vm481 = vcmp.eq.s32.totalorder %v473, 15
    %vm482 = vcmp.eq.s32.totalorder %v474, 15
    %v483 = vrot.slane %v418, 7
    %v484 = vrot.slane %v419, 7
    %v485 = vrot.slane %v420, 7
    %v486 = vrot.slane %v421, 7
    %vm487 = vcmp.lt.s32.totalorder %v423, 1
    %v488 = vsel %vm487, %v485, %v486
    %v489 = vsel %vm487, %v484, %v485
    %v490 = vsel %vm487, %v483, %v484
    %v491 = vsel %vm487, %v486, %v483
    %v492 = vsel %vm475, 1, 0
    %v493 = vsel %vm476, 1, 0
    %v494 = vsel %vm477, 1, 0
    %v495 = vsel %vm478, 1, 0
    %vm496 = vcmp.eq.s32.totalorder %v492, 1
    %vm497 = vcmp.eq.s32.totalorder %v493, 1
    %vm498 = vcmp.eq.s32.totalorder %v494, 1
    %vm499 = vcmp.eq.s32.totalorder %v495, 1
    %v500 = vsel %vm496, 0.0, %v491
    %v501 = vsel %vm497, 0.0, %v490
    %v502 = vsel %vm498, 0.0, %v489
    %v503 = vsel %vm499, 0.0, %v488
    %v504 = vrot.slane %v418, 1
    %v505 = vrot.slane %v419, 1
    %v506 = vrot.slane %v420, 1
    %v507 = vrot.slane %v421, 1
    %vm508 = vcmp.lt.s32.totalorder %v423, 7
    %v509 = vsel %vm508, %v506, %v507
    %v510 = vsel %vm508, %v505, %v506
    %v511 = vsel %vm508, %v504, %v505
    %v512 = vsel %vm508, %v507, %v504
    %v513 = vsel %vm479, 1, 0
    %v514 = vsel %vm480, 1, 0
    %v515 = vsel %vm481, 1, 0
    %v516 = vsel %vm482, 1, 0
    %vm517 = vcmp.eq.s32.totalorder %v513, 1
    %vm518 = vcmp.eq.s32.totalorder %v514, 1
    %vm519 = vcmp.eq.s32.totalorder %v515, 1
    %vm520 = vcmp.eq.s32.totalorder %v516, 1
    %v521 = vsel %vm517, 0.0, %v511
    %v522 = vsel %vm518, 0.0, %v510
    %v523 = vsel %vm519, 0.0, %v509
    %v524 = vsel %vm520, 0.0, %v512
    %v525 = vpack.c.bf16 %v501, %v500
    %v526 = vpack.c.bf16 %v503, %v502
    %v527 = vld [vmem:[%s3] sm:$0xf]
    %v528 = vld [vmem:[%s3 + $0x4] sm:$0xf]
    %v529 = vld [vmem:[%s3 + $0x8] sm:$0xf]
    %v530 = vld [vmem:[%s3 + $0xc] sm:$0xf]
    %v531 = vld [vmem:[%s3 + $0x10] sm:$0xf]
    %v532 = vld [vmem:[%s3 + $0x14] sm:$0xf]
    %v533 = vld [vmem:[%s3 + $0x18] sm:$0xf]
    %v534 = vld [vmem:[%s3 + $0x1c] sm:$0xf]
    %v535 = vld [vmem:[%s3 + $0x20] sm:$0xf]
    %v536 = vld [vmem:[%s3 + $0x24] sm:$0xf]
    %v537 = vld [vmem:[%s3 + $0x28] sm:$0xf]
    %v538 = vld [vmem:[%s3 + $0x2c] sm:$0xf]
    %v539 = vld [vmem:[%s3 + $0x30] sm:$0xf]
    %v540 = vld [vmem:[%s3 + $0x34] sm:$0xf]
    %v541 = vld [vmem:[%s3 + $0x38] sm:$0xf]
    %v542 = vld [vmem:[%s3 + $0x3c] sm:$0xf]
    %v543 = vpack.c.bf16 %v419, %v418
    %v544 = vpack.c.bf16 %v421, %v420
    %v545 = vld [vmem:[%s4] sm:$0xf]
    %v546 = vld [vmem:[%s4 + $0x4] sm:$0xf]
    %v547 = vld [vmem:[%s4 + $0x8] sm:$0xf]
    %v548 = vld [vmem:[%s4 + $0xc] sm:$0xf]
    %v549 = vld [vmem:[%s4 + $0x10] sm:$0xf]
    %v550 = vld [vmem:[%s4 + $0x14] sm:$0xf]
    %v551 = vld [vmem:[%s4 + $0x18] sm:$0xf]
    %v552 = vld [vmem:[%s4 + $0x1c] sm:$0xf]
    %v553 = vld [vmem:[%s4 + $0x20] sm:$0xf]
    %v554 = vld [vmem:[%s4 + $0x24] sm:$0xf]
    %v555 = vld [vmem:[%s4 + $0x28] sm:$0xf]
    %v556 = vld [vmem:[%s4 + $0x2c] sm:$0xf]
    %v557 = vld [vmem:[%s4 + $0x30] sm:$0xf]
    %v558 = vld [vmem:[%s4 + $0x34] sm:$0xf]
    %v559 = vld [vmem:[%s4 + $0x38] sm:$0xf]
    %v560 = vld [vmem:[%s4 + $0x3c] sm:$0xf]
    %v577 = vunpack.c.l.b16 %v545
    %v578 = vunpack.c.l.b16 %v546
    %v579 = vunpack.c.l.b16 %v547
    %v580 = vunpack.c.l.b16 %v548
    %v581 = vunpack.c.l.b16 %v549
    %v582 = vunpack.c.l.b16 %v550
    %v583 = vunpack.c.l.b16 %v551
    %v584 = vunpack.c.l.b16 %v552
    %v585 = vunpack.c.l.b16 %v553
    %v586 = vunpack.c.l.b16 %v554
    %v587 = vunpack.c.l.b16 %v555
    %v588 = vunpack.c.l.b16 %v556
    %v589 = vunpack.c.l.b16 %v557
    %v590 = vunpack.c.l.b16 %v558
    %v591 = vunpack.c.l.b16 %v559
    %v592 = vunpack.c.l.b16 %v560
    %v593 = vpack.c.b16 %v578, %v577
    %v594 = vpack.c.b16 %v580, %v579
    %v595 = vpack.c.b16 %v582, %v581
    %v596 = vpack.c.b16 %v584, %v583
    %v597 = vpack.c.b16 %v586, %v585
    %v598 = vpack.c.b16 %v588, %v587
    %v599 = vpack.c.b16 %v590, %v589
    %v600 = vpack.c.b16 %v592, %v591
    %609 = vmatprep.subr.bf16.mxu0 0
    %610 = vmatpush1.bf16.msra.mxu0 %v593
    %611 = vmatprep.subr.bf16.mxu0 0
    %612 = vmatpush1.bf16.msra.mxu0 %v594
    %613 = vmatprep.subr.bf16.mxu0 0
    %614 = vmatpush1.bf16.msra.mxu0 %v595
    %615 = vmatprep.subr.bf16.mxu0 0
    %616 = vmatpush1.bf16.msra.mxu0 %v596
    %617 = vmatprep.subr.bf16.mxu0 0
    %618 = vmatpush1.bf16.msra.mxu0 %v597
    %619 = vmatprep.subr.bf16.mxu0 0
    %620 = vmatpush1.bf16.msra.mxu0 %v598
    %621 = vmatprep.subr.bf16.mxu0 0
    %622 = vmatpush1.bf16.msra.mxu0 %v599
    %623 = vmatprep.subr.bf16.mxu0 0
    %624 = vmatpush1.bf16.msra.mxu0 %v600
    %625 = vmatprep.subr.bf16.mxu0 0
    %626 = vmatpush1.bf16.msra.mxu0 0
    %627 = vmatprep.subr.bf16.mxu0 0
    %628 = vmatpush1.bf16.msra.mxu0 0
    %629 = vmatprep.subr.bf16.mxu0 0
    %630 = vmatpush1.bf16.msra.mxu0 0
    %631 = vmatprep.subr.bf16.mxu0 0
    %632 = vmatpush1.bf16.msra.mxu0 0
    %633 = vmatprep.subr.bf16.mxu0 0
    %634 = vmatpush1.bf16.msra.mxu0 0
    %635 = vmatprep.subr.bf16.mxu0 0
    %636 = vmatpush1.bf16.msra.mxu0 0
    %637 = vmatprep.subr.bf16.mxu0 0
    %638 = vmatpush1.bf16.msra.mxu0 0
    %639 = vmatprep.subr.bf16.mxu0 0
    %640 = vmatpush1.bf16.msra.mxu0 0
    %641 = vmatprep.mubr.bf16.mxu0 0
    %642 = vmatmul.mubr.bf16.gmra.mrb[0].mxu0 %v543
    %v643 = vpop.f32.mrb[0].mxu0
    %v644 = vadd.f32 0.0, %v643
    %v645 = vpop.f32.mrb[0].mxu0
    %v646 = vpop.f32.mrb[0].mxu0
    %v647 = vadd.f32 0.0, %v646
    %v648 = vpop.f32.mrb[0].mxu0
    %649 = vmatprep.mubr.bf16.mxu0 0
    %650 = vmatmul.mubr.bf16.gmra.mrb[0].mxu0 %v544
    %v651 = vpop.f32.mrb[0].mxu0
    %v652 = vadd.f32 0.0, %v651
    %v653 = vpop.f32.mrb[0].mxu0
    %v654 = vpop.f32.mrb[0].mxu0
    %v655 = vadd.f32 0.0, %v654
    %v656 = vpop.f32.mrb[0].mxu0
    %657 = vdwg.mxu0
    %v674 = vunpack.c.l.b16 %v527
    %v675 = vunpack.c.l.b16 %v528
    %v676 = vunpack.c.l.b16 %v529
    %v677 = vunpack.c.l.b16 %v530
    %v678 = vunpack.c.l.b16 %v531
    %v679 = vunpack.c.l.b16 %v532
    %v680 = vunpack.c.l.b16 %v533
    %v681 = vunpack.c.l.b16 %v534
    %v682 = vunpack.c.l.b16 %v535
    %v683 = vunpack.c.l.b16 %v536
    %v684 = vunpack.c.l.b16 %v537
    %v685 = vunpack.c.l.b16 %v538
    %v686 = vunpack.c.l.b16 %v539
    %v687 = vunpack.c.l.b16 %v540
    %v688 = vunpack.c.l.b16 %v541
    %v689 = vunpack.c.l.b16 %v542
    %v690 = vpack.c.b16 %v675, %v674
    %v691 = vpack.c.b16 %v677, %v676
    %v692 = vpack.c.b16 %v679, %v678
    %v693 = vpack.c.b16 %v681, %v680
    %v694 = vpack.c.b16 %v683, %v682
    %v695 = vpack.c.b16 %v685, %v684
    %v696 = vpack.c.b16 %v687, %v686
    %v697 = vpack.c.b16 %v689, %v688
    %706 = vmatprep.subr.bf16.mxu0 0
    %707 = vmatpush1.bf16.msra.mxu0 %v690
    %708 = vmatprep.subr.bf16.mxu0 0
    %709 = vmatpush1.bf16.msra.mxu0 %v691
    %710 = vmatprep.subr.bf16.mxu0 0
    %711 = vmatpush1.bf16.msra.mxu0 %v692
    %712 = vmatprep.subr.bf16.mxu0 0
    %713 = vmatpush1.bf16.msra.mxu0 %v693
    %714 = vmatprep.subr.bf16.mxu0 0
    %715 = vmatpush1.bf16.msra.mxu0 %v694
    %716 = vmatprep.subr.bf16.mxu0 0
    %717 = vmatpush1.bf16.msra.mxu0 %v695
    %718 = vmatprep.subr.bf16.mxu0 0
    %719 = vmatpush1.bf16.msra.mxu0 %v696
    %720 = vmatprep.subr.bf16.mxu0 0
    %721 = vmatpush1.bf16.msra.mxu0 %v697
    %722 = vmatprep.subr.bf16.mxu0 0
    %723 = vmatpush1.bf16.msra.mxu0 0
    %724 = vmatprep.subr.bf16.mxu0 0
    %725 = vmatpush1.bf16.msra.mxu0 0
    %726 = vmatprep.subr.bf16.mxu0 0
    %727 = vmatpush1.bf16.msra.mxu0 0
    %728 = vmatprep.subr.bf16.mxu0 0
    %729 = vmatpush1.bf16.msra.mxu0 0
    %730 = vmatprep.subr.bf16.mxu0 0
    %731 = vmatpush1.bf16.msra.mxu0 0
    %732 = vmatprep.subr.bf16.mxu0 0
    %733 = vmatpush1.bf16.msra.mxu0 0
    %734 = vmatprep.subr.bf16.mxu0 0
    %735 = vmatpush1.bf16.msra.mxu0 0
    %736 = vmatprep.subr.bf16.mxu0 0
    %737 = vmatpush1.bf16.msra.mxu0 0
    %738 = vmatprep.mubr.bf16.mxu0 0
    %739 = vmatmul.mubr.bf16.gmra.mrb[0].mxu0 %v525
    %v740 = vpop.f32.mrb[0].mxu0
    %v741 = vadd.f32 %v644, %v740
    %v742 = vpop.f32.mrb[0].mxu0
    %v743 = vpop.f32.mrb[0].mxu0
    %v744 = vadd.f32 %v647, %v743
    %v745 = vpop.f32.mrb[0].mxu0
    %746 = vmatprep.mubr.bf16.mxu0 0
    %747 = vmatmul.mubr.bf16.gmra.mrb[0].mxu0 %v526
    %v748 = vpop.f32.mrb[0].mxu0
    %v749 = vadd.f32 %v652, %v748
    %v750 = vpop.f32.mrb[0].mxu0
    %v751 = vpop.f32.mrb[0].mxu0
    %v752 = vadd.f32 %v655, %v751
    %v753 = vpop.f32.mrb[0].mxu0
    %754 = vdwg.mxu0
    %v755 = vpack.c.bf16 %v522, %v521
    %v756 = vpack.c.bf16 %v524, %v523
    %v757 = vld [vmem:[%s5] sm:$0xf]
    %v758 = vld [vmem:[%s5 + $0x4] sm:$0xf]
    %v759 = vld [vmem:[%s5 + $0x8] sm:$0xf]
    %v760 = vld [vmem:[%s5 + $0xc] sm:$0xf]
    %v761 = vld [vmem:[%s5 + $0x10] sm:$0xf]
    %v762 = vld [vmem:[%s5 + $0x14] sm:$0xf]
    %v763 = vld [vmem:[%s5 + $0x18] sm:$0xf]
    %v764 = vld [vmem:[%s5 + $0x1c] sm:$0xf]
    %v765 = vld [vmem:[%s5 + $0x20] sm:$0xf]
    %v766 = vld [vmem:[%s5 + $0x24] sm:$0xf]
    %v767 = vld [vmem:[%s5 + $0x28] sm:$0xf]
    %v768 = vld [vmem:[%s5 + $0x2c] sm:$0xf]
    %v769 = vld [vmem:[%s5 + $0x30] sm:$0xf]
    %v770 = vld [vmem:[%s5 + $0x34] sm:$0xf]
    %v771 = vld [vmem:[%s5 + $0x38] sm:$0xf]
    %v772 = vld [vmem:[%s5 + $0x3c] sm:$0xf]
    %v789 = vunpack.c.l.b16 %v757
    %v790 = vunpack.c.l.b16 %v758
    %v791 = vunpack.c.l.b16 %v759
    %v792 = vunpack.c.l.b16 %v760
    %v793 = vunpack.c.l.b16 %v761
    %v794 = vunpack.c.l.b16 %v762
    %v795 = vunpack.c.l.b16 %v763
    %v796 = vunpack.c.l.b16 %v764
    %v797 = vunpack.c.l.b16 %v765
    %v798 = vunpack.c.l.b16 %v766
    %v799 = vunpack.c.l.b16 %v767
    %v800 = vunpack.c.l.b16 %v768
    %v801 = vunpack.c.l.b16 %v769
    %v802 = vunpack.c.l.b16 %v770
    %v803 = vunpack.c.l.b16 %v771
    %v804 = vunpack.c.l.b16 %v772
    %v805 = vpack.c.b16 %v790, %v789
    %v806 = vpack.c.b16 %v792, %v791
    %v807 = vpack.c.b16 %v794, %v793
    %v808 = vpack.c.b16 %v796, %v795
    %v809 = vpack.c.b16 %v798, %v797
    %v810 = vpack.c.b16 %v800, %v799
    %v811 = vpack.c.b16 %v802, %v801
    %v812 = vpack.c.b16 %v804, %v803
    %821 = vmatprep.subr.bf16.mxu0 0
    %822 = vmatpush1.bf16.msra.mxu0 %v805
    %823 = vmatprep.subr.bf16.mxu0 0
    %824 = vmatpush1.bf16.msra.mxu0 %v806
    %825 = vmatprep.subr.bf16.mxu0 0
    %826 = vmatpush1.bf16.msra.mxu0 %v807
    %827 = vmatprep.subr.bf16.mxu0 0
    %828 = vmatpush1.bf16.msra.mxu0 %v808
    %829 = vmatprep.subr.bf16.mxu0 0
    %830 = vmatpush1.bf16.msra.mxu0 %v809
    %831 = vmatprep.subr.bf16.mxu0 0
    %832 = vmatpush1.bf16.msra.mxu0 %v810
    %833 = vmatprep.subr.bf16.mxu0 0
    %834 = vmatpush1.bf16.msra.mxu0 %v811
    %835 = vmatprep.subr.bf16.mxu0 0
    %836 = vmatpush1.bf16.msra.mxu0 %v812
    %837 = vmatprep.subr.bf16.mxu0 0
    %838 = vmatpush1.bf16.msra.mxu0 0
    %839 = vmatprep.subr.bf16.mxu0 0
    %840 = vmatpush1.bf16.msra.mxu0 0
    %841 = vmatprep.subr.bf16.mxu0 0
    %842 = vmatpush1.bf16.msra.mxu0 0
    %843 = vmatprep.subr.bf16.mxu0 0
    %844 = vmatpush1.bf16.msra.mxu0 0
    %845 = vmatprep.subr.bf16.mxu0 0
    %846 = vmatpush1.bf16.msra.mxu0 0
    %847 = vmatprep.subr.bf16.mxu0 0
    %848 = vmatpush1.bf16.msra.mxu0 0
    %849 = vmatprep.subr.bf16.mxu0 0
    %850 = vmatpush1.bf16.msra.mxu0 0
    %851 = vmatprep.subr.bf16.mxu0 0
    %852 = vmatpush1.bf16.msra.mxu0 0
    %853 = vmatprep.mubr.bf16.mxu0 0
    %854 = vmatmul.mubr.bf16.gmra.mrb[0].mxu0 %v755
    %v855 = vpop.f32.mrb[0].mxu0
    %v856 = vadd.f32 0.0, %v855
    %v857 = vpop.f32.mrb[0].mxu0
    %v858 = vpop.f32.mrb[0].mxu0
    %v859 = vadd.f32 0.0, %v858
    %v860 = vpop.f32.mrb[0].mxu0
    %861 = vmatprep.mubr.bf16.mxu0 0
    %862 = vmatmul.mubr.bf16.gmra.mrb[0].mxu0 %v756
    %v863 = vpop.f32.mrb[0].mxu0
    %v864 = vadd.f32 0.0, %v863
    %v865 = vpop.f32.mrb[0].mxu0
    %v866 = vpop.f32.mrb[0].mxu0
    %v867 = vadd.f32 0.0, %v866
    %v868 = vpop.f32.mrb[0].mxu0
    %869 = vdwg.mxu0
    %v870 = vadd.f32 %v741, %v856
    %v871 = vadd.f32 %v744, %v859
    %v872 = vadd.f32 %v749, %v864
    %v873 = vadd.f32 %v752, %v867
    %v874 = vld [vmem:[%s6] sm:$0x1]
    %v876 = vlaneseq
    %v877 = vshrl.u32 %v876, 7
    %v878 = vsub.s32 0, %v877
    %v879 = vrot.slane %v874, %v878
    %v881 = vmul.f32 %v870, %v879
    %v882 = vmul.f32 %v871, %v879
    %v883 = vmul.f32 %v872, %v879
    %v884 = vmul.f32 %v873, %v879
    %v885 = vld [vmem:[%s7] sm:$0x1]
    %v887 = vlaneseq
    %v888 = vshrl.u32 %v887, 7
    %v889 = vsub.s32 0, %v888
    %v890 = vrot.slane %v885, %v889
    %v892 = vadd.f32 %v881, %v890
    %v893 = vadd.f32 %v882, %v890
    %v894 = vadd.f32 %v883, %v890
    %v895 = vadd.f32 %v884, %v890
    %v896 = vmax.f32 %v892, 0.0
    %v897 = vmax.f32 %v893, 0.0
    %v898 = vmax.f32 %v894, 0.0
    %v899 = vmax.f32 %v895, 0.0
    %v900 = vrot.slane %v896, 7
    %v901 = vrot.slane %v897, 7
    %v902 = vrot.slane %v898, 7
    %v903 = vrot.slane %v899, 7
    %v904 = vsel %vm487, %v902, %v903
    %v905 = vsel %vm487, %v901, %v902
    %v906 = vsel %vm487, %v900, %v901
    %v907 = vsel %vm487, %v903, %v900
    %v908 = vsel %vm496, 0.0, %v907
    %v909 = vsel %vm497, 0.0, %v906
    %v910 = vsel %vm498, 0.0, %v905
    %v911 = vsel %vm499, 0.0, %v904
    %v912 = vrot.slane %v896, 1
    %v913 = vrot.slane %v897, 1
    %v914 = vrot.slane %v898, 1
    %v915 = vrot.slane %v899, 1
    %v916 = vsel %vm508, %v914, %v915
    %v917 = vsel %vm508, %v913, %v914
    %v918 = vsel %vm508, %v912, %v913
    %v919 = vsel %vm508, %v915, %v912
    %v920 = vsel %vm517, 0.0, %v918
    %v921 = vsel %vm518, 0.0, %v917
    %v922 = vsel %vm519, 0.0, %v916
    %v923 = vsel %vm520, 0.0, %v919
    %v924 = vpack.c.bf16 %v909, %v908
    %v925 = vpack.c.bf16 %v911, %v910
    %v926 = vld [vmem:[%s8] sm:$0xf]
    %v927 = vld [vmem:[%s8 + $0x4] sm:$0xf]
    %v928 = vld [vmem:[%s8 + $0x8] sm:$0xf]
    %v929 = vld [vmem:[%s8 + $0xc] sm:$0xf]
    %v930 = vld [vmem:[%s8 + $0x10] sm:$0xf]
    %v931 = vld [vmem:[%s8 + $0x14] sm:$0xf]
    %v932 = vld [vmem:[%s8 + $0x18] sm:$0xf]
    %v933 = vld [vmem:[%s8 + $0x1c] sm:$0xf]
    %v934 = vld [vmem:[%s8 + $0x20] sm:$0xf]
    %v935 = vld [vmem:[%s8 + $0x24] sm:$0xf]
    %v936 = vld [vmem:[%s8 + $0x28] sm:$0xf]
    %v937 = vld [vmem:[%s8 + $0x2c] sm:$0xf]
    %v938 = vld [vmem:[%s8 + $0x30] sm:$0xf]
    %v939 = vld [vmem:[%s8 + $0x34] sm:$0xf]
    %v940 = vld [vmem:[%s8 + $0x38] sm:$0xf]
    %v941 = vld [vmem:[%s8 + $0x3c] sm:$0xf]
    %v942 = vpack.c.bf16 %v897, %v896
    %v943 = vpack.c.bf16 %v899, %v898
    %v944 = vld [vmem:[%s9] sm:$0xf]
    %v945 = vld [vmem:[%s9 + $0x4] sm:$0xf]
    %v946 = vld [vmem:[%s9 + $0x8] sm:$0xf]
    %v947 = vld [vmem:[%s9 + $0xc] sm:$0xf]
    %v948 = vld [vmem:[%s9 + $0x10] sm:$0xf]
    %v949 = vld [vmem:[%s9 + $0x14] sm:$0xf]
    %v950 = vld [vmem:[%s9 + $0x18] sm:$0xf]
    %v951 = vld [vmem:[%s9 + $0x1c] sm:$0xf]
    %v952 = vld [vmem:[%s9 + $0x20] sm:$0xf]
    %v953 = vld [vmem:[%s9 + $0x24] sm:$0xf]
    %v954 = vld [vmem:[%s9 + $0x28] sm:$0xf]
    %v955 = vld [vmem:[%s9 + $0x2c] sm:$0xf]
    %v956 = vld [vmem:[%s9 + $0x30] sm:$0xf]
    %v957 = vld [vmem:[%s9 + $0x34] sm:$0xf]
    %v958 = vld [vmem:[%s9 + $0x38] sm:$0xf]
    %v959 = vld [vmem:[%s9 + $0x3c] sm:$0xf]
    %v976 = vunpack.c.l.b16 %v944
    %v977 = vunpack.c.l.b16 %v945
    %v978 = vunpack.c.l.b16 %v946
    %v979 = vunpack.c.l.b16 %v947
    %v980 = vunpack.c.l.b16 %v948
    %v981 = vunpack.c.l.b16 %v949
    %v982 = vunpack.c.l.b16 %v950
    %v983 = vunpack.c.l.b16 %v951
    %v984 = vunpack.c.l.b16 %v952
    %v985 = vunpack.c.l.b16 %v953
    %v986 = vunpack.c.l.b16 %v954
    %v987 = vunpack.c.l.b16 %v955
    %v988 = vunpack.c.l.b16 %v956
    %v989 = vunpack.c.l.b16 %v957
    %v990 = vunpack.c.l.b16 %v958
    %v991 = vunpack.c.l.b16 %v959
    %v992 = vpack.c.b16 %v977, %v976
    %v993 = vpack.c.b16 %v979, %v978
    %v994 = vpack.c.b16 %v981, %v980
    %v995 = vpack.c.b16 %v983, %v982
    %v996 = vpack.c.b16 %v985, %v984
    %v997 = vpack.c.b16 %v987, %v986
    %v998 = vpack.c.b16 %v989, %v988
    %v999 = vpack.c.b16 %v991, %v990
    %1008 = vmatprep.subr.bf16.mxu0 0
    %1009 = vmatpush1.bf16.msra.mxu0 %v992
    %1010 = vmatprep.subr.bf16.mxu0 0
    %1011 = vmatpush1.bf16.msra.mxu0 %v993
    %1012 = vmatprep.subr.bf16.mxu0 0
    %1013 = vmatpush1.bf16.msra.mxu0 %v994
    %1014 = vmatprep.subr.bf16.mxu0 0
    %1015 = vmatpush1.bf16.msra.mxu0 %v995
    %1016 = vmatprep.subr.bf16.mxu0 0
    %1017 = vmatpush1.bf16.msra.mxu0 %v996
    %1018 = vmatprep.subr.bf16.mxu0 0
    %1019 = vmatpush1.bf16.msra.mxu0 %v997
    %1020 = vmatprep.subr.bf16.mxu0 0
    %1021 = vmatpush1.bf16.msra.mxu0 %v998
    %1022 = vmatprep.subr.bf16.mxu0 0
    %1023 = vmatpush1.bf16.msra.mxu0 %v999
    %1024 = vmatprep.subr.bf16.mxu0 0
    %1025 = vmatpush1.bf16.msra.mxu0 0
    %1026 = vmatprep.subr.bf16.mxu0 0
    %1027 = vmatpush1.bf16.msra.mxu0 0
    %1028 = vmatprep.subr.bf16.mxu0 0
    %1029 = vmatpush1.bf16.msra.mxu0 0
    %1030 = vmatprep.subr.bf16.mxu0 0
    %1031 = vmatpush1.bf16.msra.mxu0 0
    %1032 = vmatprep.subr.bf16.mxu0 0
    %1033 = vmatpush1.bf16.msra.mxu0 0
    %1034 = vmatprep.subr.bf16.mxu0 0
    %1035 = vmatpush1.bf16.msra.mxu0 0
    %1036 = vmatprep.subr.bf16.mxu0 0
    %1037 = vmatpush1.bf16.msra.mxu0 0
    %1038 = vmatprep.subr.bf16.mxu0 0
    %1039 = vmatpush1.bf16.msra.mxu0 0
    %1040 = vmatprep.mubr.bf16.mxu0 0
    %1041 = vmatmul.mubr.bf16.gmra.mrb[0].mxu0 %v942
    %v1042 = vpop.f32.mrb[0].mxu0
    %v1043 = vadd.f32 0.0, %v1042
    %v1044 = vpop.f32.mrb[0].mxu0
    %v1045 = vpop.f32.mrb[0].mxu0
    %v1046 = vadd.f32 0.0, %v1045
    %v1047 = vpop.f32.mrb[0].mxu0
    %1048 = vmatprep.mubr.bf16.mxu0 0
    %1049 = vmatmul.mubr.bf16.gmra.mrb[0].mxu0 %v943
    %v1050 = vpop.f32.mrb[0].mxu0
    %v1051 = vadd.f32 0.0, %v1050
    %v1052 = vpop.f32.mrb[0].mxu0
    %v1053 = vpop.f32.mrb[0].mxu0
    %v1054 = vadd.f32 0.0, %v1053
    %v1055 = vpop.f32.mrb[0].mxu0
    %1056 = vdwg.mxu0
    %v1073 = vunpack.c.l.b16 %v926
    %v1074 = vunpack.c.l.b16 %v927
    %v1075 = vunpack.c.l.b16 %v928
    %v1076 = vunpack.c.l.b16 %v929
    %v1077 = vunpack.c.l.b16 %v930
    %v1078 = vunpack.c.l.b16 %v931
    %v1079 = vunpack.c.l.b16 %v932
    %v1080 = vunpack.c.l.b16 %v933
    %v1081 = vunpack.c.l.b16 %v934
    %v1082 = vunpack.c.l.b16 %v935
    %v1083 = vunpack.c.l.b16 %v936
    %v1084 = vunpack.c.l.b16 %v937
    %v1085 = vunpack.c.l.b16 %v938
    %v1086 = vunpack.c.l.b16 %v939
    %v1087 = vunpack.c.l.b16 %v940
    %v1088 = vunpack.c.l.b16 %v941
    %v1089 = vpack.c.b16 %v1074, %v1073
    %v1090 = vpack.c.b16 %v1076, %v1075
    %v1091 = vpack.c.b16 %v1078, %v1077
    %v1092 = vpack.c.b16 %v1080, %v1079
    %v1093 = vpack.c.b16 %v1082, %v1081
    %v1094 = vpack.c.b16 %v1084, %v1083
    %v1095 = vpack.c.b16 %v1086, %v1085
    %v1096 = vpack.c.b16 %v1088, %v1087
    %1105 = vmatprep.subr.bf16.mxu0 0
    %1106 = vmatpush1.bf16.msra.mxu0 %v1089
    %1107 = vmatprep.subr.bf16.mxu0 0
    %1108 = vmatpush1.bf16.msra.mxu0 %v1090
    %1109 = vmatprep.subr.bf16.mxu0 0
    %1110 = vmatpush1.bf16.msra.mxu0 %v1091
    %1111 = vmatprep.subr.bf16.mxu0 0
    %1112 = vmatpush1.bf16.msra.mxu0 %v1092
    %1113 = vmatprep.subr.bf16.mxu0 0
    %1114 = vmatpush1.bf16.msra.mxu0 %v1093
    %1115 = vmatprep.subr.bf16.mxu0 0
    %1116 = vmatpush1.bf16.msra.mxu0 %v1094
    %1117 = vmatprep.subr.bf16.mxu0 0
    %1118 = vmatpush1.bf16.msra.mxu0 %v1095
    %1119 = vmatprep.subr.bf16.mxu0 0
    %1120 = vmatpush1.bf16.msra.mxu0 %v1096
    %1121 = vmatprep.subr.bf16.mxu0 0
    %1122 = vmatpush1.bf16.msra.mxu0 0
    %1123 = vmatprep.subr.bf16.mxu0 0
    %1124 = vmatpush1.bf16.msra.mxu0 0
    %1125 = vmatprep.subr.bf16.mxu0 0
    %1126 = vmatpush1.bf16.msra.mxu0 0
    %1127 = vmatprep.subr.bf16.mxu0 0
    %1128 = vmatpush1.bf16.msra.mxu0 0
    %1129 = vmatprep.subr.bf16.mxu0 0
    %1130 = vmatpush1.bf16.msra.mxu0 0
    %1131 = vmatprep.subr.bf16.mxu0 0
    %1132 = vmatpush1.bf16.msra.mxu0 0
    %1133 = vmatprep.subr.bf16.mxu0 0
    %1134 = vmatpush1.bf16.msra.mxu0 0
    %1135 = vmatprep.subr.bf16.mxu0 0
    %1136 = vmatpush1.bf16.msra.mxu0 0
    %1137 = vmatprep.mubr.bf16.mxu0 0
    %1138 = vmatmul.mubr.bf16.gmra.mrb[0].mxu0 %v924
    %v1139 = vpop.f32.mrb[0].mxu0
    %v1140 = vadd.f32 %v1043, %v1139
    %v1141 = vpop.f32.mrb[0].mxu0
    %v1142 = vpop.f32.mrb[0].mxu0
    %v1143 = vadd.f32 %v1046, %v1142
    %v1144 = vpop.f32.mrb[0].mxu0
    %1145 = vmatprep.mubr.bf16.mxu0 0
    %1146 = vmatmul.mubr.bf16.gmra.mrb[0].mxu0 %v925
    %v1147 = vpop.f32.mrb[0].mxu0
    %v1148 = vadd.f32 %v1051, %v1147
    %v1149 = vpop.f32.mrb[0].mxu0
    %v1150 = vpop.f32.mrb[0].mxu0
    %v1151 = vadd.f32 %v1054, %v1150
    %v1152 = vpop.f32.mrb[0].mxu0
    %1153 = vdwg.mxu0
    %v1154 = vpack.c.bf16 %v921, %v920
    %v1155 = vpack.c.bf16 %v923, %v922
    %v1156 = vld [vmem:[%s10] sm:$0xf]
    %v1157 = vld [vmem:[%s10 + $0x4] sm:$0xf]
    %v1158 = vld [vmem:[%s10 + $0x8] sm:$0xf]
    %v1159 = vld [vmem:[%s10 + $0xc] sm:$0xf]
    %v1160 = vld [vmem:[%s10 + $0x10] sm:$0xf]
    %v1161 = vld [vmem:[%s10 + $0x14] sm:$0xf]
    %v1162 = vld [vmem:[%s10 + $0x18] sm:$0xf]
    %v1163 = vld [vmem:[%s10 + $0x1c] sm:$0xf]
    %v1164 = vld [vmem:[%s10 + $0x20] sm:$0xf]
    %v1165 = vld [vmem:[%s10 + $0x24] sm:$0xf]
    %v1166 = vld [vmem:[%s10 + $0x28] sm:$0xf]
    %v1167 = vld [vmem:[%s10 + $0x2c] sm:$0xf]
    %v1168 = vld [vmem:[%s10 + $0x30] sm:$0xf]
    %v1169 = vld [vmem:[%s10 + $0x34] sm:$0xf]
    %v1170 = vld [vmem:[%s10 + $0x38] sm:$0xf]
    %v1171 = vld [vmem:[%s10 + $0x3c] sm:$0xf]
    %v1188 = vunpack.c.l.b16 %v1156
    %v1189 = vunpack.c.l.b16 %v1157
    %v1190 = vunpack.c.l.b16 %v1158
    %v1191 = vunpack.c.l.b16 %v1159
    %v1192 = vunpack.c.l.b16 %v1160
    %v1193 = vunpack.c.l.b16 %v1161
    %v1194 = vunpack.c.l.b16 %v1162
    %v1195 = vunpack.c.l.b16 %v1163
    %v1196 = vunpack.c.l.b16 %v1164
    %v1197 = vunpack.c.l.b16 %v1165
    %v1198 = vunpack.c.l.b16 %v1166
    %v1199 = vunpack.c.l.b16 %v1167
    %v1200 = vunpack.c.l.b16 %v1168
    %v1201 = vunpack.c.l.b16 %v1169
    %v1202 = vunpack.c.l.b16 %v1170
    %v1203 = vunpack.c.l.b16 %v1171
    %v1204 = vpack.c.b16 %v1189, %v1188
    %v1205 = vpack.c.b16 %v1191, %v1190
    %v1206 = vpack.c.b16 %v1193, %v1192
    %v1207 = vpack.c.b16 %v1195, %v1194
    %v1208 = vpack.c.b16 %v1197, %v1196
    %v1209 = vpack.c.b16 %v1199, %v1198
    %v1210 = vpack.c.b16 %v1201, %v1200
    %v1211 = vpack.c.b16 %v1203, %v1202
    %1220 = vmatprep.subr.bf16.mxu0 0
    %1221 = vmatpush1.bf16.msra.mxu0 %v1204
    %1222 = vmatprep.subr.bf16.mxu0 0
    %1223 = vmatpush1.bf16.msra.mxu0 %v1205
    %1224 = vmatprep.subr.bf16.mxu0 0
    %1225 = vmatpush1.bf16.msra.mxu0 %v1206
    %1226 = vmatprep.subr.bf16.mxu0 0
    %1227 = vmatpush1.bf16.msra.mxu0 %v1207
    %1228 = vmatprep.subr.bf16.mxu0 0
    %1229 = vmatpush1.bf16.msra.mxu0 %v1208
    %1230 = vmatprep.subr.bf16.mxu0 0
    %1231 = vmatpush1.bf16.msra.mxu0 %v1209
    %1232 = vmatprep.subr.bf16.mxu0 0
    %1233 = vmatpush1.bf16.msra.mxu0 %v1210
    %1234 = vmatprep.subr.bf16.mxu0 0
    %1235 = vmatpush1.bf16.msra.mxu0 %v1211
    %1236 = vmatprep.subr.bf16.mxu0 0
    %1237 = vmatpush1.bf16.msra.mxu0 0
    %1238 = vmatprep.subr.bf16.mxu0 0
    %1239 = vmatpush1.bf16.msra.mxu0 0
    %1240 = vmatprep.subr.bf16.mxu0 0
    %1241 = vmatpush1.bf16.msra.mxu0 0
    %1242 = vmatprep.subr.bf16.mxu0 0
    %1243 = vmatpush1.bf16.msra.mxu0 0
    %1244 = vmatprep.subr.bf16.mxu0 0
    %1245 = vmatpush1.bf16.msra.mxu0 0
    %1246 = vmatprep.subr.bf16.mxu0 0
    %1247 = vmatpush1.bf16.msra.mxu0 0
    %1248 = vmatprep.subr.bf16.mxu0 0
    %1249 = vmatpush1.bf16.msra.mxu0 0
    %1250 = vmatprep.subr.bf16.mxu0 0
    %1251 = vmatpush1.bf16.msra.mxu0 0
    %1252 = vmatprep.mubr.bf16.mxu0 0
    %1253 = vmatmul.mubr.bf16.gmra.mrb[0].mxu0 %v1154
    %v1254 = vpop.f32.mrb[0].mxu0
    %v1255 = vadd.f32 0.0, %v1254
    %v1256 = vpop.f32.mrb[0].mxu0
    %v1257 = vpop.f32.mrb[0].mxu0
    %v1258 = vadd.f32 0.0, %v1257
    %v1259 = vpop.f32.mrb[0].mxu0
    %1260 = vmatprep.mubr.bf16.mxu0 0
    %1261 = vmatmul.mubr.bf16.gmra.mrb[0].mxu0 %v1155
    %v1262 = vpop.f32.mrb[0].mxu0
    %v1263 = vadd.f32 0.0, %v1262
    %v1264 = vpop.f32.mrb[0].mxu0
    %v1265 = vpop.f32.mrb[0].mxu0
    %v1266 = vadd.f32 0.0, %v1265
    %v1267 = vpop.f32.mrb[0].mxu0
    %1268 = vdwg.mxu0
    %v1269 = vadd.f32 %v1140, %v1255
    %v1270 = vadd.f32 %v1143, %v1258
    %v1271 = vadd.f32 %v1148, %v1263
    %v1272 = vadd.f32 %v1151, %v1266
    %v1273 = vld [vmem:[%s11] sm:$0x1]
    %v1275 = vlaneseq
    %v1276 = vshrl.u32 %v1275, 7
    %v1277 = vsub.s32 0, %v1276
    %v1278 = vrot.slane %v1273, %v1277
    %v1280 = vmul.f32 %v1269, %v1278
    %v1281 = vmul.f32 %v1270, %v1278
    %v1282 = vmul.f32 %v1271, %v1278
    %v1283 = vmul.f32 %v1272, %v1278
    %v1284 = vld [vmem:[%s12] sm:$0x1]
    %v1286 = vlaneseq
    %v1287 = vshrl.u32 %v1286, 7
    %v1288 = vsub.s32 0, %v1287
    %v1289 = vrot.slane %v1284, %v1288
    %v1291 = vadd.f32 %v1280, %v1289
    %v1292 = vadd.f32 %v1281, %v1289
    %v1293 = vadd.f32 %v1282, %v1289
    %v1294 = vadd.f32 %v1283, %v1289
    %v1295 = vmax.f32 %v1291, 0.0
    %v1296 = vmax.f32 %v1292, 0.0
    %v1297 = vmax.f32 %v1293, 0.0
    %v1298 = vmax.f32 %v1294, 0.0
    %v1299 = vpack.c.bf16 %v1296, %v1295
    %v1300 = vpack.c.bf16 %v1298, %v1297
    %v1301 = vld [vmem:[%s13] sm:$0xf]
    %v1302 = vld [vmem:[%s13 + $0x4] sm:$0xf]
    %v1303 = vld [vmem:[%s13 + $0x8] sm:$0xf]
    %v1304 = vld [vmem:[%s13 + $0xc] sm:$0xf]
    %v1305 = vld [vmem:[%s13 + $0x10] sm:$0xf]
    %v1306 = vld [vmem:[%s13 + $0x14] sm:$0xf]
    %v1307 = vld [vmem:[%s13 + $0x18] sm:$0xf]
    %v1308 = vld [vmem:[%s13 + $0x1c] sm:$0xf]
    %v1309 = vld [vmem:[%s13 + $0x20] sm:$0xf]
    %v1310 = vld [vmem:[%s13 + $0x24] sm:$0xf]
    %v1311 = vld [vmem:[%s13 + $0x28] sm:$0xf]
    %v1312 = vld [vmem:[%s13 + $0x2c] sm:$0xf]
    %v1313 = vld [vmem:[%s13 + $0x30] sm:$0xf]
    %v1314 = vld [vmem:[%s13 + $0x34] sm:$0xf]
    %v1315 = vld [vmem:[%s13 + $0x38] sm:$0xf]
    %v1316 = vld [vmem:[%s13 + $0x3c] sm:$0xf]
    %v1333 = vunpack.c.l.b16 %v1301
    %v1334 = vunpack.c.l.b16 %v1302
    %v1335 = vunpack.c.l.b16 %v1303
    %v1336 = vunpack.c.l.b16 %v1304
    %v1337 = vunpack.c.l.b16 %v1305
    %v1338 = vunpack.c.l.b16 %v1306
    %v1339 = vunpack.c.l.b16 %v1307
    %v1340 = vunpack.c.l.b16 %v1308
    %v1341 = vunpack.c.l.b16 %v1309
    %v1342 = vunpack.c.l.b16 %v1310
    %v1343 = vunpack.c.l.b16 %v1311
    %v1344 = vunpack.c.l.b16 %v1312
    %v1345 = vunpack.c.l.b16 %v1313
    %v1346 = vunpack.c.l.b16 %v1314
    %v1347 = vunpack.c.l.b16 %v1315
    %v1348 = vunpack.c.l.b16 %v1316
    %v1349 = vpack.c.b16 %v1334, %v1333
    %v1350 = vpack.c.b16 %v1336, %v1335
    %v1351 = vpack.c.b16 %v1338, %v1337
    %v1352 = vpack.c.b16 %v1340, %v1339
    %v1353 = vpack.c.b16 %v1342, %v1341
    %v1354 = vpack.c.b16 %v1344, %v1343
    %v1355 = vpack.c.b16 %v1346, %v1345
    %v1356 = vpack.c.b16 %v1348, %v1347
    %1365 = vmatprep.subr.bf16.mxu0 0
    %1366 = vmatpush1.bf16.msra.mxu0 %v1349
    %1367 = vmatprep.subr.bf16.mxu0 0
    %1368 = vmatpush1.bf16.msra.mxu0 %v1350
    %1369 = vmatprep.subr.bf16.mxu0 0
    %1370 = vmatpush1.bf16.msra.mxu0 %v1351
    %1371 = vmatprep.subr.bf16.mxu0 0
    %1372 = vmatpush1.bf16.msra.mxu0 %v1352
    %1373 = vmatprep.subr.bf16.mxu0 0
    %1374 = vmatpush1.bf16.msra.mxu0 %v1353
    %1375 = vmatprep.subr.bf16.mxu0 0
    %1376 = vmatpush1.bf16.msra.mxu0 %v1354
    %1377 = vmatprep.subr.bf16.mxu0 0
    %1378 = vmatpush1.bf16.msra.mxu0 %v1355
    %1379 = vmatprep.subr.bf16.mxu0 0
    %1380 = vmatpush1.bf16.msra.mxu0 %v1356
    %1381 = vmatprep.subr.bf16.mxu0 0
    %1382 = vmatpush1.bf16.msra.mxu0 0
    %1383 = vmatprep.subr.bf16.mxu0 0
    %1384 = vmatpush1.bf16.msra.mxu0 0
    %1385 = vmatprep.subr.bf16.mxu0 0
    %1386 = vmatpush1.bf16.msra.mxu0 0
    %1387 = vmatprep.subr.bf16.mxu0 0
    %1388 = vmatpush1.bf16.msra.mxu0 0
    %1389 = vmatprep.subr.bf16.mxu0 0
    %1390 = vmatpush1.bf16.msra.mxu0 0
    %1391 = vmatprep.subr.bf16.mxu0 0
    %1392 = vmatpush1.bf16.msra.mxu0 0
    %1393 = vmatprep.subr.bf16.mxu0 0
    %1394 = vmatpush1.bf16.msra.mxu0 0
    %1395 = vmatprep.subr.bf16.mxu0 0
    %1396 = vmatpush1.bf16.msra.mxu0 0
    %1397 = vmatprep.mubr.bf16.mxu0 0
    %1398 = vmatmul.mubr.bf16.gmra.mrb[0].mxu0 %v1299
    %v1399 = vpop.f32.mrb[0].mxu0
    %v1400 = vadd.f32 0.0, %v1399
    %v1401 = vpop.f32.mrb[0].mxu0
    %v1402 = vpop.f32.mrb[0].mxu0
    %v1403 = vadd.f32 0.0, %v1402
    %v1404 = vpop.f32.mrb[0].mxu0
    %1405 = vmatprep.mubr.bf16.mxu0 0
    %1406 = vmatmul.mubr.bf16.gmra.mrb[0].mxu0 %v1300
    %v1407 = vpop.f32.mrb[0].mxu0
    %v1408 = vadd.f32 0.0, %v1407
    %v1409 = vpop.f32.mrb[0].mxu0
    %v1410 = vpop.f32.mrb[0].mxu0
    %v1411 = vadd.f32 0.0, %v1410
    %v1412 = vpop.f32.mrb[0].mxu0
    %1413 = vdwg.mxu0
    %v1414 = vld [vmem:[%s14] sm:$0x1]
    %v1416 = vlaneseq
    %v1417 = vshrl.u32 %v1416, 7
    %v1418 = vsub.s32 0, %v1417
    %v1419 = vrot.slane %v1414, %v1418
    %v1421 = vmul.f32 %v1400, %v1419
    %v1422 = vmul.f32 %v1403, %v1419
    %v1423 = vmul.f32 %v1408, %v1419
    %v1424 = vmul.f32 %v1411, %v1419
    %v1425 = vld [vmem:[%s15] sm:$0x1]
    %v1427 = vlaneseq
    %v1428 = vshrl.u32 %v1427, 7
    %v1429 = vsub.s32 0, %v1428
    %v1430 = vrot.slane %v1425, %v1429
    %v1432 = vadd.f32 %v1421, %v1430
    %v1433 = vadd.f32 %v1422, %v1430
    %v1434 = vadd.f32 %v1423, %v1430
    %v1435 = vadd.f32 %v1424, %v1430
    %v1436 = vmax.f32 %v1432, 0.0
    %v1437 = vmax.f32 %v1433, 0.0
    %v1438 = vmax.f32 %v1434, 0.0
    %v1439 = vmax.f32 %v1435, 0.0
    %v1440 = vadd.f32 %v1436, %v1437
    %v1441 = vrot.slane %v1440, 4
    %v1442 = vadd.f32 %v1440, %v1441
    %v1443 = vrot.slane %v1442, 2
    %v1444 = vadd.f32 %v1442, %v1443
    %v1445 = vrot.slane %v1444, 1
    %v1446 = vadd.f32 %v1444, %v1445
    %v1447 = vadd.f32 %v1438, %v1439
    %v1448 = vrot.slane %v1447, 4
    %v1449 = vadd.f32 %v1447, %v1448
    %v1450 = vrot.slane %v1449, 2
    %v1451 = vadd.f32 %v1449, %v1450
    %v1452 = vrot.slane %v1451, 1
    %v1453 = vadd.f32 %v1451, %v1452
    %v1454 = vmul.f32 %v1446, %v372
    %v1455 = vmul.f32 %v1453, %v372
    %v1456 = vsub.f32 %v1436, %v1454
    %v1457 = vsub.f32 %v1437, %v1454
    %v1458 = vsub.f32 %v1438, %v1455
    %v1459 = vsub.f32 %v1439, %v1455
    %v1460 = vmul.f32 %v1456, %v1456
    %v1461 = vmul.f32 %v1457, %v1457
    %v1462 = vmul.f32 %v1458, %v1458
    %v1463 = vmul.f32 %v1459, %v1459
    %v1464 = vadd.f32 %v1460, %v1461
    %v1465 = vrot.slane %v1464, 4
    %v1466 = vadd.f32 %v1464, %v1465
    %v1467 = vrot.slane %v1466, 2
    %v1468 = vadd.f32 %v1466, %v1467
    %v1469 = vrot.slane %v1468, 1
    %v1470 = vadd.f32 %v1468, %v1469
    %v1471 = vadd.f32 %v1462, %v1463
    %v1472 = vrot.slane %v1471, 4
    %v1473 = vadd.f32 %v1471, %v1472
    %v1474 = vrot.slane %v1473, 2
    %v1475 = vadd.f32 %v1473, %v1474
    %v1476 = vrot.slane %v1475, 1
    %v1477 = vadd.f32 %v1475, %v1476
    %v1478 = vmul.f32 %v1470, %v397
    %v1479 = vmul.f32 %v1477, %v397
    %v1480 = vrsqrt.pop %v1478
    %v1481 = vmul.f32 %v1478, %v1480
    %vm1482 = vcmp.eq.f32.partialorder %v1478, inf
    %v1483 = vsel %vm1482, %v1478, %v1481
    %vm1484 = vcmp.eq.f32.partialorder %v1478, 0.0
    %v1485 = vand.u32 %v1478, 2147483648
    %v1486 = vsel %vm1484, %v1485, %v1483
    %v1487 = vrsqrt.pop %v1479
    %v1488 = vmul.f32 %v1479, %v1487
    %vm1489 = vcmp.eq.f32.partialorder %v1479, inf
    %v1490 = vsel %vm1489, %v1479, %v1488
    %vm1491 = vcmp.eq.f32.partialorder %v1479, 0.0
    %v1492 = vand.u32 %v1479, 2147483648
    %v1493 = vsel %vm1491, %v1492, %v1490
    %vm1496 = vcmask 1041409
    %v1497 = vsel %vm1496, %v1455, %v1454
    %v1501 = vsel %vm1496, %v1493, %v1486
    %v1503 = vpack.c.bf16 %v1497, %v1497
    %v1504 = vpack.c.bf16 %v1501, %v1501
    %v1505 = vld [vmem:[%s16] sm:$0xf]
    %v1506 = vld [vmem:[%s16 + $0x4] sm:$0xf]
    %v1507 = vld [vmem:[%s16 + $0x8] sm:$0xf]
    %v1508 = vld [vmem:[%s16 + $0xc] sm:$0xf]
    %v1509 = vld [vmem:[%s16 + $0x10] sm:$0xf]
    %v1510 = vld [vmem:[%s16 + $0x14] sm:$0xf]
    %v1511 = vld [vmem:[%s16 + $0x18] sm:$0xf]
    %v1512 = vld [vmem:[%s16 + $0x1c] sm:$0xf]
    %v1513 = vld [vmem:[%s16 + $0x20] sm:$0xf]
    %v1514 = vld [vmem:[%s16 + $0x24] sm:$0xf]
    %v1515 = vld [vmem:[%s16 + $0x28] sm:$0xf]
    %v1516 = vld [vmem:[%s16 + $0x2c] sm:$0xf]
    %v1517 = vld [vmem:[%s16 + $0x30] sm:$0xf]
    %v1518 = vld [vmem:[%s16 + $0x34] sm:$0xf]
    %v1519 = vld [vmem:[%s16 + $0x38] sm:$0xf]
    %v1520 = vld [vmem:[%s16 + $0x3c] sm:$0xf]
    %v1521 = vld [vmem:[%s16 + $0x40] sm:$0xf]
    %v1522 = vld [vmem:[%s16 + $0x44] sm:$0xf]
    %v1523 = vld [vmem:[%s16 + $0x48] sm:$0xf]
    %v1524 = vld [vmem:[%s16 + $0x4c] sm:$0xf]
    %v1525 = vld [vmem:[%s16 + $0x50] sm:$0xf]
    %v1526 = vld [vmem:[%s16 + $0x54] sm:$0xf]
    %v1527 = vld [vmem:[%s16 + $0x58] sm:$0xf]
    %v1528 = vld [vmem:[%s16 + $0x5c] sm:$0xf]
    %v1529 = vld [vmem:[%s16 + $0x60] sm:$0xf]
    %v1530 = vld [vmem:[%s16 + $0x64] sm:$0xf]
    %v1531 = vld [vmem:[%s16 + $0x68] sm:$0xf]
    %v1532 = vld [vmem:[%s16 + $0x6c] sm:$0xf]
    %v1533 = vld [vmem:[%s16 + $0x70] sm:$0xf]
    %v1534 = vld [vmem:[%s16 + $0x74] sm:$0xf]
    %v1535 = vld [vmem:[%s16 + $0x78] sm:$0xf]
    %v1536 = vld [vmem:[%s16 + $0x7c] sm:$0xf]
    %v1537 = vld [vmem:[%s17] sm:$0x1]
    %v1539 = vlaneseq
    %v1540 = vshrl.u32 %v1539, 7
    %v1541 = vsub.s32 0, %v1540
    %v1542 = vrot.slane %v1537, %v1541
    %v1576 = vunpack.c.l.b16 %v1505
    %v1577 = vunpack.c.l.b16 %v1506
    %v1578 = vunpack.c.l.b16 %v1507
    %v1579 = vunpack.c.l.b16 %v1508
    %v1580 = vunpack.c.l.b16 %v1509
    %v1581 = vunpack.c.l.b16 %v1510
    %v1582 = vunpack.c.l.b16 %v1511
    %v1583 = vunpack.c.l.b16 %v1512
    %v1584 = vunpack.c.l.b16 %v1513
    %v1585 = vunpack.c.l.b16 %v1514
    %v1586 = vunpack.c.l.b16 %v1515
    %v1587 = vunpack.c.l.b16 %v1516
    %v1588 = vunpack.c.l.b16 %v1517
    %v1589 = vunpack.c.l.b16 %v1518
    %v1590 = vunpack.c.l.b16 %v1519
    %v1591 = vunpack.c.l.b16 %v1520
    %v1592 = vunpack.c.l.b16 %v1521
    %v1593 = vunpack.c.l.b16 %v1522
    %v1594 = vunpack.c.l.b16 %v1523
    %v1595 = vunpack.c.l.b16 %v1524
    %v1596 = vunpack.c.l.b16 %v1525
    %v1597 = vunpack.c.l.b16 %v1526
    %v1598 = vunpack.c.l.b16 %v1527
    %v1599 = vunpack.c.l.b16 %v1528
    %v1600 = vunpack.c.l.b16 %v1529
    %v1601 = vunpack.c.l.b16 %v1530
    %v1602 = vunpack.c.l.b16 %v1531
    %v1603 = vunpack.c.l.b16 %v1532
    %v1604 = vunpack.c.l.b16 %v1533
    %v1605 = vunpack.c.l.b16 %v1534
    %v1606 = vunpack.c.l.b16 %v1535
    %v1607 = vunpack.c.l.b16 %v1536
    %v1608 = vpack.c.b16 %v1577, %v1576
    %v1609 = vpack.c.b16 %v1579, %v1578
    %v1610 = vpack.c.b16 %v1581, %v1580
    %v1611 = vpack.c.b16 %v1583, %v1582
    %v1612 = vpack.c.b16 %v1585, %v1584
    %v1613 = vpack.c.b16 %v1587, %v1586
    %v1614 = vpack.c.b16 %v1589, %v1588
    %v1615 = vpack.c.b16 %v1591, %v1590
    %v1616 = vpack.c.b16 %v1593, %v1592
    %v1617 = vpack.c.b16 %v1595, %v1594
    %v1618 = vpack.c.b16 %v1597, %v1596
    %v1619 = vpack.c.b16 %v1599, %v1598
    %v1620 = vpack.c.b16 %v1601, %v1600
    %v1621 = vpack.c.b16 %v1603, %v1602
    %v1622 = vpack.c.b16 %v1605, %v1604
    %v1623 = vpack.c.b16 %v1607, %v1606
    %1640 = vmatprep.subr.bf16.mxu0 0
    %1641 = vmatpush1.bf16.msra.mxu0 %v1608
    %1642 = vmatprep.subr.bf16.mxu0 0
    %1643 = vmatpush1.bf16.msra.mxu0 %v1609
    %1644 = vmatprep.subr.bf16.mxu0 0
    %1645 = vmatpush1.bf16.msra.mxu0 %v1610
    %1646 = vmatprep.subr.bf16.mxu0 0
    %1647 = vmatpush1.bf16.msra.mxu0 %v1611
    %1648 = vmatprep.subr.bf16.mxu0 0
    %1649 = vmatpush1.bf16.msra.mxu0 %v1612
    %1650 = vmatprep.subr.bf16.mxu0 0
    %1651 = vmatpush1.bf16.msra.mxu0 %v1613
    %1652 = vmatprep.subr.bf16.mxu0 0
    %1653 = vmatpush1.bf16.msra.mxu0 %v1614
    %1654 = vmatprep.subr.bf16.mxu0 0
    %1655 = vmatpush1.bf16.msra.mxu0 %v1615
    %1656 = vmatprep.subr.bf16.mxu0 0
    %1657 = vmatpush1.bf16.msra.mxu0 %v1616
    %1658 = vmatprep.subr.bf16.mxu0 0
    %1659 = vmatpush1.bf16.msra.mxu0 %v1617
    %1660 = vmatprep.subr.bf16.mxu0 0
    %1661 = vmatpush1.bf16.msra.mxu0 %v1618
    %1662 = vmatprep.subr.bf16.mxu0 0
    %1663 = vmatpush1.bf16.msra.mxu0 %v1619
    %1664 = vmatprep.subr.bf16.mxu0 0
    %1665 = vmatpush1.bf16.msra.mxu0 %v1620
    %1666 = vmatprep.subr.bf16.mxu0 0
    %1667 = vmatpush1.bf16.msra.mxu0 %v1621
    %1668 = vmatprep.subr.bf16.mxu0 0
    %1669 = vmatpush1.bf16.msra.mxu0 %v1622
    %1670 = vmatprep.subr.bf16.mxu0 0
    %1671 = vmatpush1.bf16.msra.mxu0 %v1623
    %1672 = vmatprep.mubr.bf16.mxu0 %v1504
    %1673 = vmatmul.mubr.bf16.gmra.mrb[0].mxu0 %v1503
    %v1674 = vpop.f32.mrb[0].mxu0
    %v1675 = vadd.f32 %v1542, %v1674
    %v1676 = vpop.f32.mrb[0].mxu0
    %v1677 = vpop.f32.mrb[0].mxu0
    %v1678 = vpop.f32.mrb[0].mxu0
    %1679 = vdwg.mxu0
    %v1680 = vld [vmem:[%s18] sm:$0x1]
    %v1682 = vlaneseq
    %v1683 = vshrl.u32 %v1682, 7
    %v1684 = vsub.s32 0, %v1683
    %v1685 = vrot.slane %v1680, %v1684
    %v1687 = vmul.f32 %v1675, %v1685
    %v1688 = vld [vmem:[%s19] sm:$0x1]
    %v1690 = vlaneseq
    %v1691 = vshrl.u32 %v1690, 7
    %v1692 = vsub.s32 0, %v1691
    %v1693 = vrot.slane %v1688, %v1692
    %v1695 = vadd.f32 %v1687, %v1693
    %1696 = vst [vmem:[#allocation4] sm:$0x3] %v1695
    %v1697 = vmax.f32 %v1695, 0.0
    %v1698 = vpack.c.bf16 %v1697, %v1697
    %v1699 = vld [vmem:[%s20] sm:$0xf]
    %v1700 = vld [vmem:[%s20 + $0x4] sm:$0xf]
    %v1701 = vld [vmem:[%s20 + $0x8] sm:$0xf]
    %v1702 = vld [vmem:[%s20 + $0xc] sm:$0xf]
    %v1703 = vld [vmem:[%s20 + $0x10] sm:$0xf]
    %v1704 = vld [vmem:[%s20 + $0x14] sm:$0xf]
    %v1705 = vld [vmem:[%s20 + $0x18] sm:$0xf]
    %v1706 = vld [vmem:[%s20 + $0x1c] sm:$0xf]
    %v1707 = vld [vmem:[%s20 + $0x20] sm:$0xf]
    %v1708 = vld [vmem:[%s20 + $0x24] sm:$0xf]
    %v1709 = vld [vmem:[%s20 + $0x28] sm:$0xf]
    %v1710 = vld [vmem:[%s20 + $0x2c] sm:$0xf]
    %v1711 = vld [vmem:[%s20 + $0x30] sm:$0xf]
    %v1712 = vld [vmem:[%s20 + $0x34] sm:$0xf]
    %v1713 = vld [vmem:[%s20 + $0x38] sm:$0xf]
    %v1714 = vld [vmem:[%s20 + $0x3c] sm:$0xf]
    %v1715 = vld [vmem:[%s21] sm:$0x1]
    %v1717 = vlaneseq
    %v1718 = vshrl.u32 %v1717, 7
    %v1719 = vsub.s32 0, %v1718
    %v1720 = vrot.slane %v1715, %v1719
    %v1738 = vunpack.c.l.b16 %v1699
    %v1739 = vunpack.c.l.b16 %v1700
    %v1740 = vunpack.c.l.b16 %v1701
    %v1741 = vunpack.c.l.b16 %v1702
    %v1742 = vunpack.c.l.b16 %v1703
    %v1743 = vunpack.c.l.b16 %v1704
    %v1744 = vunpack.c.l.b16 %v1705
    %v1745 = vunpack.c.l.b16 %v1706
    %v1746 = vunpack.c.l.b16 %v1707
    %v1747 = vunpack.c.l.b16 %v1708
    %v1748 = vunpack.c.l.b16 %v1709
    %v1749 = vunpack.c.l.b16 %v1710
    %v1750 = vunpack.c.l.b16 %v1711
    %v1751 = vunpack.c.l.b16 %v1712
    %v1752 = vunpack.c.l.b16 %v1713
    %v1753 = vunpack.c.l.b16 %v1714
    %v1754 = vpack.c.b16 %v1739, %v1738
    %v1755 = vpack.c.b16 %v1741, %v1740
    %v1756 = vpack.c.b16 %v1743, %v1742
    %v1757 = vpack.c.b16 %v1745, %v1744
    %v1758 = vpack.c.b16 %v1747, %v1746
    %v1759 = vpack.c.b16 %v1749, %v1748
    %v1760 = vpack.c.b16 %v1751, %v1750
    %v1761 = vpack.c.b16 %v1753, %v1752
    %1770 = vmatprep.subr.bf16.mxu0 0
    %1771 = vmatpush1.bf16.msra.mxu0 %v1754
    %1772 = vmatprep.subr.bf16.mxu0 0
    %1773 = vmatpush1.bf16.msra.mxu0 %v1755
    %1774 = vmatprep.subr.bf16.mxu0 0
    %1775 = vmatpush1.bf16.msra.mxu0 %v1756
    %1776 = vmatprep.subr.bf16.mxu0 0
    %1777 = vmatpush1.bf16.msra.mxu0 %v1757
    %1778 = vmatprep.subr.bf16.mxu0 0
    %1779 = vmatpush1.bf16.msra.mxu0 %v1758
    %1780 = vmatprep.subr.bf16.mxu0 0
    %1781 = vmatpush1.bf16.msra.mxu0 %v1759
    %1782 = vmatprep.subr.bf16.mxu0 0
    %1783 = vmatpush1.bf16.msra.mxu0 %v1760
    %1784 = vmatprep.subr.bf16.mxu0 0
    %1785 = vmatpush1.bf16.msra.mxu0 %v1761
    %1786 = vmatprep.subr.bf16.mxu0 0
    %1787 = vmatpush1.bf16.msra.mxu0 0
    %1788 = vmatprep.subr.bf16.mxu0 0
    %1789 = vmatpush1.bf16.msra.mxu0 0
    %1790 = vmatprep.subr.bf16.mxu0 0
    %1791 = vmatpush1.bf16.msra.mxu0 0
    %1792 = vmatprep.subr.bf16.mxu0 0
    %1793 = vmatpush1.bf16.msra.mxu0 0
    %1794 = vmatprep.subr.bf16.mxu0 0
    %1795 = vmatpush1.bf16.msra.mxu0 0
    %1796 = vmatprep.subr.bf16.mxu0 0
    %1797 = vmatpush1.bf16.msra.mxu0 0
    %1798 = vmatprep.subr.bf16.mxu0 0
    %1799 = vmatpush1.bf16.msra.mxu0 0
    %1800 = vmatprep.subr.bf16.mxu0 0
    %1801 = vmatpush1.bf16.msra.mxu0 0
    %1802 = vmatprep.mubr.bf16.mxu0 0
    %1803 = vmatmul.mubr.bf16.gmra.mrb[0].mxu0 %v1698
    %v1804 = vpop.f32.mrb[0].mxu0
    %v1805 = vadd.f32 %v1720, %v1804
    %v1806 = vpop.f32.mrb[0].mxu0
    %v1807 = vpop.f32.mrb[0].mxu0
    %v1808 = vpop.f32.mrb[0].mxu0
    %1809 = vdwg.mxu0
    %1810 = vst [vmem:[#allocation2] sm:$0x3] %v1805
    // Predicated region
    $region90: #{speaker_vector_forward.1} parent=1 // pred_check
      _
    $region91: #{speaker_vector_forward.1} parent=1 // pred_check_branch
      %1812 = sbr.rel (0) target = $region93
    $region92: #{speaker_vector_forward.1} parent=1 // pred_region
      %s1814 = ssub.s32 32, 32
      %1815 = vsyncadd [#allocation3], %s1814
      %s1817 = sshll.u32 [#allocation2], 4
      %s1818 = int_to_ptr.vmem [resolvable:$true] %s1817
      %1820 = dma.vmem_to_hbm [thread:$0]  %s1818, 32, %s22, [#allocation3]
    $region93: #{speaker_vector_forward.1} parent=1 // pred_fallthru
      _
    // Predicated region
    $region94: #{speaker_vector_forward.1} parent=1 // pred_check
      _
    $region95: #{speaker_vector_forward.1} parent=1 // pred_check_branch
      %1822 = sbr.rel (0) target = $region97
    $region96: #{speaker_vector_forward.1} parent=1 // pred_region
      %s1824 = ssub.s32 32, 32
      %1825 = vsyncadd [#allocation5], %s1824
      %s1827 = sshll.u32 [#allocation4], 4
      %s1828 = int_to_ptr.vmem [resolvable:$true] %s1827
      %1830 = dma.vmem_to_hbm [thread:$0]  %s1828, 32, %s23, [#allocation5]
    $region97: #{speaker_vector_forward.1} parent=1 // pred_fallthru
      _
    // Predicated region
    $region98: #{speaker_vector_forward.1} parent=1 // pred_check
      _
    $region99: #{speaker_vector_forward.1} parent=1 // pred_check_branch
      %1832 = sbr.rel (0) target = $region101
    $region100: #{speaker_vector_forward.1} parent=1 // pred_region
      %1833 = dma.done [#allocation3], 32
    $region101: #{speaker_vector_forward.1} parent=1 // pred_fallthru
      _
    // Predicated region
    $region102: #{speaker_vector_forward.1} parent=1 // pred_check
      _
    $region103: #{speaker_vector_forward.1} parent=1 // pred_check_branch
      %1835 = sbr.rel (0) target = $region105
    $region104: #{speaker_vector_forward.1} parent=1 // pred_region
      %1836 = dma.done [#allocation5], 32
    $region105: #{speaker_vector_forward.1} parent=1 // pred_fallthru
      _
    %1837 = vsyncpa [#allocation3], 1
    %1838 = vsyncpa [#allocation5], 1

</llo_original>
